<compile_context>
chip_gen: v7x
topology: tpu7x:2x2x1
jax: 0.10.0
libtpu: 0.0.40
codegen_flags: <defaults>
</compile_context>

<pallas_src>
import numpy as np
import jax
import jax.numpy as jnp
from jax.experimental import pallas as pl
from jax.experimental.pallas import tpu as pltpu

NEG_SLOPE = 0.2      # LeakyReLU negative slope
BN_EPS = 1e-5
LANE = 128           # lane-dense padding target for hidden / output dims


def _round_up(n, m):
    return (n + m - 1) // m * m


def _choose_tiling(m):
    """Pick (TM, padded_M).

    Prefer the largest TM in {512, 256, 128} that gives >= 2 grid steps
    (so v7x's 2 TensorCores both get work via the "parallel" axis) while
    keeping row padding below one full tile.  Small batches fall back to a
    single full-batch step padded to a sublane multiple.
    """
    for tm in (512, 256, 128):
        m_p = _round_up(m, tm)
        if m_p // tm >= 2 and (m_p - m) < tm:
            return tm, m_p
    m_p = _round_up(m, 8)
    return m_p, m_p


# ----------------------------------------------------------------------------
# Fused FCBlock kernel: whole forward chain for one (TM, *) row tile.
# refs = [x, w_fc1, s_fc1, (w1, s1, w2, s2) * block_num, w_fc2, s_fc2, out]
# Weights are bf16 (BN pre-folded); shifts are f32; epilogue math is f32.
# ----------------------------------------------------------------------------
def _make_fcblock_kernel(block_num):
    def kernel(*refs):
        x_ref = refs[0]
        o_ref = refs[-1]
        p = refs[1:-1]                       # alternating (weight, shift) pairs

        def layer(h, w_ref, s_ref, relu):
            # bf16 MXU inputs, f32 accumulation (v5e/v6e/v7x full rate).
            y = jnp.dot(h.astype(jnp.bfloat16), w_ref[...],
                        preferred_element_type=jnp.float32)
            y = y + s_ref[...]               # BN/bias folded into shift (f32)
            if relu:
                y = jnp.maximum(y, NEG_SLOPE * y)   # LeakyReLU(0.2): mul+max
            return y

        # fc_1 + bn_1 + LeakyReLU  (x_ref is f32, K = channel_in, unpadded)
        h = layer(x_ref[...], p[0], p[1], True)

        # residual Linear blocks (dropout = identity in eval mode)
        k = 2
        for _ in range(block_num):
            y = layer(h, p[k], p[k + 1], True)
            y = layer(y, p[k + 2], p[k + 3], True)
            h = h + y                        # residual add in f32
            k += 4

        # fc_2 (bias only, no BN / activation); store bf16 (halved writeback)
        o_ref[...] = layer(h, p[k], p[k + 1], False).astype(o_ref.dtype)
    return kernel


# ----------------------------------------------------------------------------
# Parameter preparation (done ONCE, outside the per-call hot path):
# fold BatchNorm into weights, pad hidden/out dims to lane multiples, cast bf16.
# ----------------------------------------------------------------------------
def _fold_linear_bn(w, b, bn=None):
    """nn.Linear (w:(out,in), b:(out,)) [+ BatchNorm1d eval] -> y = x @ Wf + shift."""
    wf = w.T                                  # (in, out)
    if bn is None:
        return wf, b
    gamma, beta, mean, var = bn
    scale = gamma / jnp.sqrt(var + BN_EPS)
    return wf * scale[None, :], b * scale + beta - mean * scale


def prepare_operands(params, block_num):
    cin = params['fc1_w'].shape[1]
    lsz = params['fc1_w'].shape[0]
    cout = params['fc2_w'].shape[0]
    lsz_p = _round_up(lsz, LANE)
    cout_p = _round_up(cout, LANE)

    def pack(w, s, rows, cols):
        wp = jnp.zeros((rows, cols), jnp.float32).at[:w.shape[0], :w.shape[1]].set(w)
        sp = jnp.zeros((1, cols), jnp.float32).at[0, :s.shape[0]].set(s)
        return [wp.astype(jnp.bfloat16), sp]

    ops = []
    # fc_1: rows = cin (unpadded) so x needs NO column padding in the wrapper.
    w, s = _fold_linear_bn(params['fc1_w'], params['fc1_b'], params['bn1'])
    ops += pack(w, s, cin, lsz_p)
    for i in range(block_num):
        blk = params['blocks'][i]
        w, s = _fold_linear_bn(blk['w1'], blk['b1'], blk['bn1'])
        ops += pack(w, s, lsz_p, lsz_p)
        w, s = _fold_linear_bn(blk['w2'], blk['b2'], blk['bn2'])
        ops += pack(w, s, lsz_p, lsz_p)
    w, s = _fold_linear_bn(params['fc2_w'], params['fc2_b'], None)
    ops += pack(w, s, lsz_p, cout_p)
    return ops, (cin, lsz_p, cout_p, cout)


# ----------------------------------------------------------------------------
# Wrapper: tile the batch dim, launch the fused kernel.
# Returns the PADDED bf16 output (m_p, cout_p); consumer slices [:M, :cout].
# ----------------------------------------------------------------------------
def fcblock_forward(x, ops, dims, block_num):
    cin, lsz_p, cout_p, _ = dims
    M = x.shape[0]
    tm, m_p = _choose_tiling(M)
    if m_p != M:                              # row pad only when strictly needed
        x = jnp.zeros((m_p, cin), x.dtype).at[:M].set(x)

    # x: natural K = cin (full-array last dim -> legal, no masked-store issue
    # since it is an input).  Weights/shifts: grid-invariant, VMEM-resident.
    in_specs = [pl.BlockSpec((tm, cin), lambda i: (i, 0))]
    for op in ops:
        in_specs.append(pl.BlockSpec(op.shape, lambda i: (0, 0)))

    flops = 2 * m_p * (cin * lsz_p
                       + 2 * block_num * lsz_p * lsz_p
                       + lsz_p * cout_p)
    bytes_accessed = (m_p * cin * x.dtype.itemsize
                      + sum(int(np.prod(o.shape)) * o.dtype.itemsize for o in ops)
                      + m_p * cout_p * 2)     # bf16 output

    out = pl.pallas_call(
        _make_fcblock_kernel(block_num),
        out_shape=jax.ShapeDtypeStruct((m_p, cout_p), jnp.bfloat16),
        grid=(m_p // tm,),
        in_specs=in_specs,
        out_specs=pl.BlockSpec((tm, cout_p), lambda i: (i, 0)),
        compiler_params=pltpu.CompilerParams(
            dimension_semantics=("parallel",)),      # megacore-shardable M axis
        cost_estimate=pl.CostEstimate(flops=flops, transcendentals=0,
                                      bytes_accessed=bytes_accessed),
    )(x, *ops)
    return out                                 # padded; slice at the consumer


# ----------------------------------------------------------------------------
# Pure-JAX reference mirroring the PyTorch forward (f32, eval mode).
# ----------------------------------------------------------------------------
def reference_forward(x, params, block_num):
    def linear(h, w, b):
        return h @ w.T + b

    def bn(h, p):
        gamma, beta, mean, var = p
        return (h - mean) * (gamma / jnp.sqrt(var + BN_EPS)) + beta

    def lrelu(h):
        return jnp.where(h > 0, h, NEG_SLOPE * h)

    h = lrelu(bn(linear(x, params['fc1_w'], params['fc1_b']), params['bn1']))
    for i in range(block_num):
        blk = params['blocks'][i]
        y = lrelu(bn(linear(h, blk['w1'], blk['b1']), blk['bn1']))
        y = lrelu(bn(linear(y, blk['w2'], blk['b2']), blk['bn2']))
        h = h + y
    return linear(h, params['fc2_w'], params['fc2_b'])


# ----------------------------------------------------------------------------
# Deterministic parameter init (shapes follow FCBlock.__init__)
# ----------------------------------------------------------------------------
def init_params(key, channel_in, channel_out, linear_size, block_num):
    keys = iter(jax.random.split(key, 16 + 12 * block_num))

    def lin(out_f, in_f):
        w = 0.1 * jax.random.normal(next(keys), (out_f, in_f), jnp.float32)
        b = 0.05 * jax.random.normal(next(keys), (out_f,), jnp.float32)
        return w, b

    def bn(c):
        gamma = 1.0 + 0.1 * jax.random.normal(next(keys), (c,), jnp.float32)
        beta = 0.05 * jax.random.normal(next(keys), (c,), jnp.float32)
        mean = 0.1 * jax.random.normal(next(keys), (c,), jnp.float32)
        var = 0.5 + jax.random.uniform(next(keys), (c,), jnp.float32)
        return (gamma, beta, mean, var)

    w1, b1 = lin(linear_size, channel_in)
    params = {'fc1_w': w1, 'fc1_b': b1, 'bn1': bn(linear_size), 'blocks': []}
    for _ in range(block_num):
        wa, ba = lin(linear_size, linear_size)
        wb, bb = lin(linear_size, linear_size)
        params['blocks'].append({'w1': wa, 'b1': ba, 'bn1': bn(linear_size),
                                 'w2': wb, 'b2': bb, 'bn2': bn(linear_size)})
    w2, b2 = lin(channel_out, linear_size)
    params['fc2_w'] = w2
    params['fc2_b'] = b2
    return params


if __name__ == "__main__":
    # FCBlock(channel_in=32, channel_out=48, linear_size=128, block_num=2), eval.
    channel_in, channel_out = 32, 48
    linear_size, block_num = 128, 2
    B = 256                                   # -> TM=128, grid=2 (v7x-friendly)

    key = jax.random.PRNGKey(0)
    pkey, xkey = jax.random.split(key)
    params = init_params(pkey, channel_in, channel_out, linear_size, block_num)
    x = jax.random.normal(xkey, (B, channel_in), jnp.float32)

    # One-time setup: fold BN, pad hidden/out dims, cast weights to bf16.
    ops, dims = prepare_operands(params, block_num)

    fwd = jax.jit(lambda xi: fcblock_forward(xi, ops, dims, block_num))
    out_padded = jax.block_until_ready(fwd(x))

    # Lazy consumer-side slice of the padded bf16 output.
    cout = dims[3]
    out = np.asarray(out_padded[:B, :cout], dtype=np.float32)
    ref = np.asarray(reference_forward(x, params, block_num))

    assert out.shape == ref.shape == (B, channel_out), (out.shape, ref.shape)
    # bf16 MXU inputs + bf16 output with f32 accumulation -> small bounded drift.
    np.testing.assert_allclose(out, ref, rtol=3e-2, atol=3e-2)
    print("KERNEL_OK")
</pallas_src>

<mosaic_0001>
module attributes {stable_mosaic.version = 11 : i64} {
  func.func @kernel(%arg0: i32, %arg1: memref<128x32xf32, #tpu.memory_space<vmem>>, %arg2: memref<32x128xbf16, #tpu.memory_space<vmem>>, %arg3: memref<1x128xf32, #tpu.memory_space<vmem>>, %arg4: memref<128x128xbf16, #tpu.memory_space<vmem>>, %arg5: memref<1x128xf32, #tpu.memory_space<vmem>>, %arg6: memref<128x128xbf16, #tpu.memory_space<vmem>>, %arg7: memref<1x128xf32, #tpu.memory_space<vmem>>, %arg8: memref<128x128xbf16, #tpu.memory_space<vmem>>, %arg9: memref<1x128xf32, #tpu.memory_space<vmem>>, %arg10: memref<128x128xbf16, #tpu.memory_space<vmem>>, %arg11: memref<1x128xf32, #tpu.memory_space<vmem>>, %arg12: memref<128x128xbf16, #tpu.memory_space<vmem>>, %arg13: memref<1x128xf32, #tpu.memory_space<vmem>>, %arg14: memref<128x128xbf16, #tpu.memory_space<vmem>>) attributes {dimension_semantics = [#tpu.dimension_semantics<parallel>], iteration_bounds = array<i64: 2>, scalar_prefetch = 0 : i64, scratch_operands = 0 : i64, tpu.core_type = #tpu.core_type<tc>, window_params = [{transform_indices = @transform_0, window_bounds = array<i64: 128, 32>}, {pipeline_mode = #tpu.pipeline_mode<synchronous>, transform_indices = @transform_1, window_bounds = array<i64: 32, 128>}, {pipeline_mode = #tpu.pipeline_mode<synchronous>, transform_indices = @transform_2, window_bounds = array<i64: 1, 128>}, {pipeline_mode = #tpu.pipeline_mode<synchronous>, transform_indices = @transform_3, window_bounds = array<i64: 128, 128>}, {pipeline_mode = #tpu.pipeline_mode<synchronous>, transform_indices = @transform_4, window_bounds = array<i64: 1, 128>}, {pipeline_mode = #tpu.pipeline_mode<synchronous>, transform_indices = @transform_5, window_bounds = array<i64: 128, 128>}, {pipeline_mode = #tpu.pipeline_mode<synchronous>, transform_indices = @transform_6, window_bounds = array<i64: 1, 128>}, {pipeline_mode = #tpu.pipeline_mode<synchronous>, transform_indices = @transform_7, window_bounds = array<i64: 128, 128>}, {pipeline_mode = #tpu.pipeline_mode<synchronous>, transform_indices = @transform_8, window_bounds = array<i64: 1, 128>}, {pipeline_mode = #tpu.pipeline_mode<synchronous>, transform_indices = @transform_9, window_bounds = array<i64: 128, 128>}, {pipeline_mode = #tpu.pipeline_mode<synchronous>, transform_indices = @transform_10, window_bounds = array<i64: 1, 128>}, {pipeline_mode = #tpu.pipeline_mode<synchronous>, transform_indices = @transform_11, window_bounds = array<i64: 128, 128>}, {pipeline_mode = #tpu.pipeline_mode<synchronous>, transform_indices = @transform_12, window_bounds = array<i64: 1, 128>}, {transform_indices = @transform_13, window_bounds = array<i64: 128, 128>}]} {
    %c0 = arith.constant 0 : index
    %c0_0 = arith.constant 0 : index
    %0 = vector.load %arg1[%c0, %c0_0] : memref<128x32xf32, #tpu.memory_space<vmem>>, vector<128x32xf32>
    %1 = arith.truncf %0 : vector<128x32xf32> to vector<128x32xbf16>
    %c0_1 = arith.constant 0 : index
    %c0_2 = arith.constant 0 : index
    %2 = vector.load %arg2[%c0_1, %c0_2] : memref<32x128xbf16, #tpu.memory_space<vmem>>, vector<32x128xbf16>
    %cst = arith.constant dense<0.000000e+00> : vector<128x128xf32>
    %3 = tpu.matmul %1, %2, %cst {dimension_numbers = #tpu.dot_dimension_numbers<[1], [0], [0], [1], [0, 0, 1, 1], [], []>} : vector<128x32xbf16>, vector<32x128xbf16>, vector<128x128xf32> -> vector<128x128xf32>
    %c0_3 = arith.constant 0 : index
    %c0_4 = arith.constant 0 : index
    %4 = vector.load %arg3[%c0_3, %c0_4] : memref<1x128xf32, #tpu.memory_space<vmem>>, vector<1x128xf32>
    %5 = vector.broadcast %4 : vector<1x128xf32> to vector<128x128xf32>
    %6 = arith.addf %3, %5 : vector<128x128xf32>
    %cst_5 = arith.constant 2.000000e-01 : f32
    %7 = vector.broadcast %cst_5 : f32 to vector<128x128xf32>
    %8 = arith.mulf %7, %6 : vector<128x128xf32>
    %9 = arith.maximumf %6, %8 : vector<128x128xf32>
    %10 = arith.truncf %9 : vector<128x128xf32> to vector<128x128xbf16>
    %c0_6 = arith.constant 0 : index
    %c0_7 = arith.constant 0 : index
    %11 = vector.load %arg4[%c0_6, %c0_7] : memref<128x128xbf16, #tpu.memory_space<vmem>>, vector<128x128xbf16>
    %cst_8 = arith.constant dense<0.000000e+00> : vector<128x128xf32>
    %12 = tpu.matmul %10, %11, %cst_8 {dimension_numbers = #tpu.dot_dimension_numbers<[1], [0], [0], [1], [0, 0, 1, 1], [], []>} : vector<128x128xbf16>, vector<128x128xbf16>, vector<128x128xf32> -> vector<128x128xf32>
    %c0_9 = arith.constant 0 : index
    %c0_10 = arith.constant 0 : index
    %13 = vector.load %arg5[%c0_9, %c0_10] : memref<1x128xf32, #tpu.memory_space<vmem>>, vector<1x128xf32>
    %14 = vector.broadcast %13 : vector<1x128xf32> to vector<128x128xf32>
    %15 = arith.addf %12, %14 : vector<128x128xf32>
    %cst_11 = arith.constant 2.000000e-01 : f32
    %16 = vector.broadcast %cst_11 : f32 to vector<128x128xf32>
    %17 = arith.mulf %16, %15 : vector<128x128xf32>
    %18 = arith.maximumf %15, %17 : vector<128x128xf32>
    %19 = arith.truncf %18 : vector<128x128xf32> to vector<128x128xbf16>
    %c0_12 = arith.constant 0 : index
    %c0_13 = arith.constant 0 : index
    %20 = vector.load %arg6[%c0_12, %c0_13] : memref<128x128xbf16, #tpu.memory_space<vmem>>, vector<128x128xbf16>
    %cst_14 = arith.constant dense<0.000000e+00> : vector<128x128xf32>
    %21 = tpu.matmul %19, %20, %cst_14 {dimension_numbers = #tpu.dot_dimension_numbers<[1], [0], [0], [1], [0, 0, 1, 1], [], []>} : vector<128x128xbf16>, vector<128x128xbf16>, vector<128x128xf32> -> vector<128x128xf32>
    %c0_15 = arith.constant 0 : index
    %c0_16 = arith.constant 0 : index
    %22 = vector.load %arg7[%c0_15, %c0_16] : memref<1x128xf32, #tpu.memory_space<vmem>>, vector<1x128xf32>
    %23 = vector.broadcast %22 : vector<1x128xf32> to vector<128x128xf32>
    %24 = arith.addf %21, %23 : vector<128x128xf32>
    %cst_17 = arith.constant 2.000000e-01 : f32
    %25 = vector.broadcast %cst_17 : f32 to vector<128x128xf32>
    %26 = arith.mulf %25, %24 : vector<128x128xf32>
    %27 = arith.maximumf %24, %26 : vector<128x128xf32>
    %28 = arith.addf %9, %27 : vector<128x128xf32>
    %29 = arith.truncf %28 : vector<128x128xf32> to vector<128x128xbf16>
    %c0_18 = arith.constant 0 : index
    %c0_19 = arith.constant 0 : index
    %30 = vector.load %arg8[%c0_18, %c0_19] : memref<128x128xbf16, #tpu.memory_space<vmem>>, vector<128x128xbf16>
    %cst_20 = arith.constant dense<0.000000e+00> : vector<128x128xf32>
    %31 = tpu.matmul %29, %30, %cst_20 {dimension_numbers = #tpu.dot_dimension_numbers<[1], [0], [0], [1], [0, 0, 1, 1], [], []>} : vector<128x128xbf16>, vector<128x128xbf16>, vector<128x128xf32> -> vector<128x128xf32>
    %c0_21 = arith.constant 0 : index
    %c0_22 = arith.constant 0 : index
    %32 = vector.load %arg9[%c0_21, %c0_22] : memref<1x128xf32, #tpu.memory_space<vmem>>, vector<1x128xf32>
    %33 = vector.broadcast %32 : vector<1x128xf32> to vector<128x128xf32>
    %34 = arith.addf %31, %33 : vector<128x128xf32>
    %cst_23 = arith.constant 2.000000e-01 : f32
    %35 = vector.broadcast %cst_23 : f32 to vector<128x128xf32>
    %36 = arith.mulf %35, %34 : vector<128x128xf32>
    %37 = arith.maximumf %34, %36 : vector<128x128xf32>
    %38 = arith.truncf %37 : vector<128x128xf32> to vector<128x128xbf16>
    %c0_24 = arith.constant 0 : index
    %c0_25 = arith.constant 0 : index
    %39 = vector.load %arg10[%c0_24, %c0_25] : memref<128x128xbf16, #tpu.memory_space<vmem>>, vector<128x128xbf16>
    %cst_26 = arith.constant dense<0.000000e+00> : vector<128x128xf32>
    %40 = tpu.matmul %38, %39, %cst_26 {dimension_numbers = #tpu.dot_dimension_numbers<[1], [0], [0], [1], [0, 0, 1, 1], [], []>} : vector<128x128xbf16>, vector<128x128xbf16>, vector<128x128xf32> -> vector<128x128xf32>
    %c0_27 = arith.constant 0 : index
    %c0_28 = arith.constant 0 : index
    %41 = vector.load %arg11[%c0_27, %c0_28] : memref<1x128xf32, #tpu.memory_space<vmem>>, vector<1x128xf32>
    %42 = vector.broadcast %41 : vector<1x128xf32> to vector<128x128xf32>
    %43 = arith.addf %40, %42 : vector<128x128xf32>
    %cst_29 = arith.constant 2.000000e-01 : f32
    %44 = vector.broadcast %cst_29 : f32 to vector<128x128xf32>
    %45 = arith.mulf %44, %43 : vector<128x128xf32>
    %46 = arith.maximumf %43, %45 : vector<128x128xf32>
    %47 = arith.addf %28, %46 : vector<128x128xf32>
    %48 = arith.truncf %47 : vector<128x128xf32> to vector<128x128xbf16>
    %c0_30 = arith.constant 0 : index
    %c0_31 = arith.constant 0 : index
    %49 = vector.load %arg12[%c0_30, %c0_31] : memref<128x128xbf16, #tpu.memory_space<vmem>>, vector<128x128xbf16>
    %cst_32 = arith.constant dense<0.000000e+00> : vector<128x128xf32>
    %50 = tpu.matmul %48, %49, %cst_32 {dimension_numbers = #tpu.dot_dimension_numbers<[1], [0], [0], [1], [0, 0, 1, 1], [], []>} : vector<128x128xbf16>, vector<128x128xbf16>, vector<128x128xf32> -> vector<128x128xf32>
    %c0_33 = arith.constant 0 : index
    %c0_34 = arith.constant 0 : index
    %51 = vector.load %arg13[%c0_33, %c0_34] : memref<1x128xf32, #tpu.memory_space<vmem>>, vector<1x128xf32>
    %52 = vector.broadcast %51 : vector<1x128xf32> to vector<128x128xf32>
    %53 = arith.addf %50, %52 : vector<128x128xf32>
    %54 = arith.truncf %53 : vector<128x128xf32> to vector<128x128xbf16>
    %c0_35 = arith.constant 0 : index
    %c0_36 = arith.constant 0 : index
    %55 = vector.load %arg14[%c0_35, %c0_36] : memref<128x128xbf16, #tpu.memory_space<vmem>>, vector<128x128xbf16>
    tpu.vector_store %arg14[%c0_35, %c0_36], %54 {strides = array<i32>} : memref<128x128xbf16, #tpu.memory_space<vmem>>, vector<128x128xbf16>,
    return
  }
  func.func @transform_0(%arg0: i32) -> (i32, i32) {
    %c0_i32 = arith.constant 0 : i32
    %c0_i32_0 = arith.constant 0 : i32
    return %arg0, %c0_i32 : i32, i32
  }
  func.func @transform_1(%arg0: i32) -> (i32, i32) {
    %c0_i32 = arith.constant 0 : i32
    %c0_i32_0 = arith.constant 0 : i32
    %c0_i32_1 = arith.constant 0 : i32
    return %c0_i32, %c0_i32_0 : i32, i32
  }
  func.func @transform_2(%arg0: i32) -> (i32, i32) {
    %c0_i32 = arith.constant 0 : i32
    %c0_i32_0 = arith.constant 0 : i32
    %c0_i32_1 = arith.constant 0 : i32
    return %c0_i32, %c0_i32_0 : i32, i32
  }
  func.func @transform_3(%arg0: i32) -> (i32, i32) {
    %c0_i32 = arith.constant 0 : i32
    %c0_i32_0 = arith.constant 0 : i32
    %c0_i32_1 = arith.constant 0 : i32
    return %c0_i32, %c0_i32_0 : i32, i32
  }
  func.func @transform_4(%arg0: i32) -> (i32, i32) {
    %c0_i32 = arith.constant 0 : i32
    %c0_i32_0 = arith.constant 0 : i32
    %c0_i32_1 = arith.constant 0 : i32
    return %c0_i32, %c0_i32_0 : i32, i32
  }
  func.func @transform_5(%arg0: i32) -> (i32, i32) {
    %c0_i32 = arith.constant 0 : i32
    %c0_i32_0 = arith.constant 0 : i32
    %c0_i32_1 = arith.constant 0 : i32
    return %c0_i32, %c0_i32_0 : i32, i32
  }
  func.func @transform_6(%arg0: i32) -> (i32, i32) {
    %c0_i32 = arith.constant 0 : i32
    %c0_i32_0 = arith.constant 0 : i32
    %c0_i32_1 = arith.constant 0 : i32
    return %c0_i32, %c0_i32_0 : i32, i32
  }
  func.func @transform_7(%arg0: i32) -> (i32, i32) {
    %c0_i32 = arith.constant 0 : i32
    %c0_i32_0 = arith.constant 0 : i32
    %c0_i32_1 = arith.constant 0 : i32
    return %c0_i32, %c0_i32_0 : i32, i32
  }
  func.func @transform_8(%arg0: i32) -> (i32, i32) {
    %c0_i32 = arith.constant 0 : i32
    %c0_i32_0 = arith.constant 0 : i32
    %c0_i32_1 = arith.constant 0 : i32
    return %c0_i32, %c0_i32_0 : i32, i32
  }
  func.func @transform_9(%arg0: i32) -> (i32, i32) {
    %c0_i32 = arith.constant 0 : i32
    %c0_i32_0 = arith.constant 0 : i32
    %c0_i32_1 = arith.constant 0 : i32
    return %c0_i32, %c0_i32_0 : i32, i32
  }
  func.func @transform_10(%arg0: i32) -> (i32, i32) {
    %c0_i32 = arith.constant 0 : i32
    %c0_i32_0 = arith.constant 0 : i32
    %c0_i32_1 = arith.constant 0 : i32
    return %c0_i32, %c0_i32_0 : i32, i32
  }
  func.func @transform_11(%arg0: i32) -> (i32, i32) {
    %c0_i32 = arith.constant 0 : i32
    %c0_i32_0 = arith.constant 0 : i32
    %c0_i32_1 = arith.constant 0 : i32
    return %c0_i32, %c0_i32_0 : i32, i32
  }
  func.func @transform_12(%arg0: i32) -> (i32, i32) {
    %c0_i32 = arith.constant 0 : i32
    %c0_i32_0 = arith.constant 0 : i32
    %c0_i32_1 = arith.constant 0 : i32
    return %c0_i32, %c0_i32_0 : i32, i32
  }
  func.func @transform_13(%arg0: i32) -> (i32, i32) {
    %c0_i32 = arith.constant 0 : i32
    %c0_i32_0 = arith.constant 0 : i32
    return %arg0, %c0_i32 : i32, i32
  }
}

</mosaic_0001>

<llo_original>
// kernel: _lambda_.1
$region0: #{_lambda_.1}
  #allocation0 [shape = 'u32[]', space=smem, size = 0x4, offset = 0x4, fixed_abs, tag = 'smem constant byte address 0x4 - core index']
  #allocation1 [shape = 'u32[144,128]{1,0:T(1,128)}', space=vmem, size = 0x12000, scoped, tag = 'internal scratch']
  %s0 = inlined_call_operand.vmem [shape: f32[256,32], index: 0, kind: input, shape index: {}]
  %s1 = inlined_call_operand.vmem [shape: bf16[32,128], index: 1, kind: input, shape index: {}]
  %s2 = inlined_call_operand.vmem [shape: f32[1,128], index: 2, kind: input, shape index: {}]
  %s3 = inlined_call_operand.vmem [shape: bf16[128,128], index: 3, kind: input, shape index: {}]
  %s4 = inlined_call_operand.vmem [shape: f32[1,128], index: 4, kind: input, shape index: {}]
  %s5 = inlined_call_operand.vmem [shape: bf16[128,128], index: 5, kind: input, shape index: {}]
  %s6 = inlined_call_operand.vmem [shape: f32[1,128], index: 6, kind: input, shape index: {}]
  %s7 = inlined_call_operand.vmem [shape: bf16[128,128], index: 7, kind: input, shape index: {}]
  %s8 = inlined_call_operand.vmem [shape: f32[1,128], index: 8, kind: input, shape index: {}]
  %s9 = inlined_call_operand.vmem [shape: bf16[128,128], index: 9, kind: input, shape index: {}]
  %s10 = inlined_call_operand.vmem [shape: f32[1,128], index: 10, kind: input, shape index: {}]
  %s11 = inlined_call_operand.vmem [shape: bf16[128,128], index: 11, kind: input, shape index: {}]
  %s12 = inlined_call_operand.vmem [shape: f32[1,128], index: 12, kind: input, shape index: {}]
  %s13 = inlined_call_operand.hbm [shape: bf16[256,128], index: 13, kind: output, shape index: {}]
  %s14 = sld [smem:[#allocation0]]
  $region85: #{_lambda_.1} parent=0
    _
  %s16 = ssub.s32 1, %s14
  %s17 = scalar_select 0, %s16, %s14
  $region1: #{_lambda_.1} parent=0
    #allocation2 [shape = 'u8[65536]{0}', space=vmem, size = 0x10000, scoped, tag = 'output window, operand 0']
    #allocation3 [shape = 's32[2]{0}', space=sflag, size = 0x8, scoped, tag = 'scoped memory for _lambda_.1']
    %18 = vsyncpa [#allocation3], 0
    %s19 = scalar_lea.sflag [#allocation3], 1
    %20 = vsyncpa %s19, 0
    loop: start=0, step=1, limit=4
    $region2: #{_lambda_.1} parent=1 // loop_pre_header
      _
    $region3: #{_lambda_.1} parent=1 // loop_header
      %s22 = sphi 0, %s26
      %p23 = scmp.ge.s32.totalorder %s22, 4
      %s32 = sphi 0, %s34
      %s35 = sphi 0, %s32
      %s36 = sphi 0, %s35
      %s52 = sphi 0, %s36
      %s56 = sphi 0, %s56
      %s58 = sphi 0, %s56
      %s59 = sphi 0, %s58
      %s73 = sphi 0, %s59
      %s77 = sphi 0, %s77
      %s79 = sphi 0, %s77
      %s80 = sphi 0, %s79
      %s94 = sphi 0, %s80
      %s98 = sphi 0, %s98
      %s100 = sphi 0, %s98
      %s101 = sphi 0, %s100
      %s115 = sphi 0, %s101
      %s119 = sphi 0, %s119
      %s121 = sphi 0, %s119
      %s122 = sphi 0, %s121
      %s136 = sphi 0, %s122
      %s140 = sphi 0, %s140
      %s142 = sphi 0, %s140
      %s143 = sphi 0, %s142
      %s157 = sphi 0, %s143
      %s161 = sphi 0, %s161
      %s163 = sphi 0, %s161
      %s164 = sphi 0, %s163
      %s178 = sphi 0, %s164
      %s182 = sphi 0, %s182
      %s184 = sphi 0, %s182
      %s185 = sphi 0, %s184
      %s199 = sphi 0, %s185
      %s203 = sphi 0, %s203
      %s205 = sphi 0, %s203
      %s206 = sphi 0, %s205
      %s220 = sphi 0, %s206
      %s224 = sphi 0, %s224
      %s226 = sphi 0, %s224
      %s227 = sphi 0, %s226
      %s241 = sphi 0, %s227
      %s245 = sphi 0, %s245
      %s247 = sphi 0, %s245
      %s248 = sphi 0, %s247
      %s262 = sphi 0, %s248
      %s266 = sphi 0, %s266
      %s268 = sphi 0, %s266
      %s269 = sphi 0, %s268
      %s283 = sphi 0, %s269
      %s287 = sphi 0, %s287
      %s289 = sphi 0, %s287
      %s290 = sphi 0, %s289
      %s304 = sphi 0, %s290
      %s310 = sphi 0, %s312
      %s313 = sphi 0, %s310
      %s314 = sphi 0, %s313
      %s330 = sphi 0, %s314
    $region4: #{_lambda_.1} parent=1 // loop_header_branch
      %25 = sbr.rel (%p23) target = $region8
    $region5: #{_lambda_.1} parent=1 // loop_body
      %s27 = ssub.s32 %s22, 1
      %s28 = ssub.s32 %s22, 2
      %s29 = sadd.s32 %s22, 1
      %s30 = ssub.s32 %s22, %s29
      %p31 = scmp.eq.s32.totalorder %s30, 0
      %s33 = sadd.s32 %s32, 1
      %s34 = scalar_select %p31, %s32, %s33
      %p37 = pneg %p31
      %p38 = scmp.eq.s32.totalorder %s22, 1
      %p39 = por %p37, %p38
      %p40 = scmp.ne.s32.totalorder %s32, %s35
      %p41 = scmp.eq.s32.totalorder %s22, 0
      %p42 = por %p40, %p41
      %p43 = scmp.ne.s32.totalorder %s32, %s35
      %p44 = scmp.eq.s32.totalorder %s27, 1
      %p45 = por %p43, %p44
      %p46 = scmp.ne.s32.totalorder %s35, %s36
      %p47 = scmp.eq.s32.totalorder %s27, 0
      %p48 = por %p46, %p47
      %p49 = scmp.ne.s32.totalorder %s35, %s36
      %p50 = scmp.eq.s32.totalorder %s28, 1
      %p51 = por %p49, %p50
      %p53 = scmp.ne.s32.totalorder %s36, %s52
      %p54 = scmp.eq.s32.totalorder %s28, 0
      %p55 = por %p53, %p54
      %s57 = sadd.s32 %s56, 1
      %p60 = scmp.eq.s32.totalorder %s22, 1
      %p61 = scmp.ne.s32.totalorder %s56, %s58
      %p62 = scmp.eq.s32.totalorder %s22, 0
      %p63 = por %p61, %p62
      %p64 = scmp.ne.s32.totalorder %s56, %s58
      %p65 = scmp.eq.s32.totalorder %s27, 1
      %p66 = por %p64, %p65
      %p67 = scmp.ne.s32.totalorder %s58, %s59
      %p68 = scmp.eq.s32.totalorder %s27, 0
      %p69 = por %p67, %p68
      %p70 = scmp.ne.s32.totalorder %s58, %s59
      %p71 = scmp.eq.s32.totalorder %s28, 1
      %p72 = por %p70, %p71
      %p74 = scmp.ne.s32.totalorder %s59, %s73
      %p75 = scmp.eq.s32.totalorder %s28, 0
      %p76 = por %p74, %p75
      %s78 = sadd.s32 %s77, 1
      %p81 = scmp.eq.s32.totalorder %s22, 1
      %p82 = scmp.ne.s32.totalorder %s77, %s79
      %p83 = scmp.eq.s32.totalorder %s22, 0
      %p84 = por %p82, %p83
      %p85 = scmp.ne.s32.totalorder %s77, %s79
      %p86 = scmp.eq.s32.totalorder %s27, 1
      %p87 = por %p85, %p86
      %p88 = scmp.ne.s32.totalorder %s79, %s80
      %p89 = scmp.eq.s32.totalorder %s27, 0
      %p90 = por %p88, %p89
      %p91 = scmp.ne.s32.totalorder %s79, %s80
      %p92 = scmp.eq.s32.totalorder %s28, 1
      %p93 = por %p91, %p92
      %p95 = scmp.ne.s32.totalorder %s80, %s94
      %p96 = scmp.eq.s32.totalorder %s28, 0
      %p97 = por %p95, %p96
      %s99 = sadd.s32 %s98, 1
      %p102 = scmp.eq.s32.totalorder %s22, 1
      %p103 = scmp.ne.s32.totalorder %s98, %s100
      %p104 = scmp.eq.s32.totalorder %s22, 0
      %p105 = por %p103, %p104
      %p106 = scmp.ne.s32.totalorder %s98, %s100
      %p107 = scmp.eq.s32.totalorder %s27, 1
      %p108 = por %p106, %p107
      %p109 = scmp.ne.s32.totalorder %s100, %s101
      %p110 = scmp.eq.s32.totalorder %s27, 0
      %p111 = por %p109, %p110
      %p112 = scmp.ne.s32.totalorder %s100, %s101
      %p113 = scmp.eq.s32.totalorder %s28, 1
      %p114 = por %p112, %p113
      %p116 = scmp.ne.s32.totalorder %s101, %s115
      %p117 = scmp.eq.s32.totalorder %s28, 0
      %p118 = por %p116, %p117
      %s120 = sadd.s32 %s119, 1
      %p123 = scmp.eq.s32.totalorder %s22, 1
      %p124 = scmp.ne.s32.totalorder %s119, %s121
      %p125 = scmp.eq.s32.totalorder %s22, 0
      %p126 = por %p124, %p125
      %p127 = scmp.ne.s32.totalorder %s119, %s121
      %p128 = scmp.eq.s32.totalorder %s27, 1
      %p129 = por %p127, %p128
      %p130 = scmp.ne.s32.totalorder %s121, %s122
      %p131 = scmp.eq.s32.totalorder %s27, 0
      %p132 = por %p130, %p131
      %p133 = scmp.ne.s32.totalorder %s121, %s122
      %p134 = scmp.eq.s32.totalorder %s28, 1
      %p135 = por %p133, %p134
      %p137 = scmp.ne.s32.totalorder %s122, %s136
      %p138 = scmp.eq.s32.totalorder %s28, 0
      %p139 = por %p137, %p138
      %s141 = sadd.s32 %s140, 1
      %p144 = scmp.eq.s32.totalorder %s22, 1
      %p145 = scmp.ne.s32.totalorder %s140, %s142
      %p146 = scmp.eq.s32.totalorder %s22, 0
      %p147 = por %p145, %p146
      %p148 = scmp.ne.s32.totalorder %s140, %s142
      %p149 = scmp.eq.s32.totalorder %s27, 1
      %p150 = por %p148, %p149
      %p151 = scmp.ne.s32.totalorder %s142, %s143
      %p152 = scmp.eq.s32.totalorder %s27, 0
      %p153 = por %p151, %p152
      %p154 = scmp.ne.s32.totalorder %s142, %s143
      %p155 = scmp.eq.s32.totalorder %s28, 1
      %p156 = por %p154, %p155
      %p158 = scmp.ne.s32.totalorder %s143, %s157
      %p159 = scmp.eq.s32.totalorder %s28, 0
      %p160 = por %p158, %p159
      %s162 = sadd.s32 %s161, 1
      %p165 = scmp.eq.s32.totalorder %s22, 1
      %p166 = scmp.ne.s32.totalorder %s161, %s163
      %p167 = scmp.eq.s32.totalorder %s22, 0
      %p168 = por %p166, %p167
      %p169 = scmp.ne.s32.totalorder %s161, %s163
      %p170 = scmp.eq.s32.totalorder %s27, 1
      %p171 = por %p169, %p170
      %p172 = scmp.ne.s32.totalorder %s163, %s164
      %p173 = scmp.eq.s32.totalorder %s27, 0
      %p174 = por %p172, %p173
      %p175 = scmp.ne.s32.totalorder %s163, %s164
      %p176 = scmp.eq.s32.totalorder %s28, 1
      %p177 = por %p175, %p176
      %p179 = scmp.ne.s32.totalorder %s164, %s178
      %p180 = scmp.eq.s32.totalorder %s28, 0
      %p181 = por %p179, %p180
      %s183 = sadd.s32 %s182, 1
      %p186 = scmp.eq.s32.totalorder %s22, 1
      %p187 = scmp.ne.s32.totalorder %s182, %s184
      %p188 = scmp.eq.s32.totalorder %s22, 0
      %p189 = por %p187, %p188
      %p190 = scmp.ne.s32.totalorder %s182, %s184
      %p191 = scmp.eq.s32.totalorder %s27, 1
      %p192 = por %p190, %p191
      %p193 = scmp.ne.s32.totalorder %s184, %s185
      %p194 = scmp.eq.s32.totalorder %s27, 0
      %p195 = por %p193, %p194
      %p196 = scmp.ne.s32.totalorder %s184, %s185
      %p197 = scmp.eq.s32.totalorder %s28, 1
      %p198 = por %p196, %p197
      %p200 = scmp.ne.s32.totalorder %s185, %s199
      %p201 = scmp.eq.s32.totalorder %s28, 0
      %p202 = por %p200, %p201
      %s204 = sadd.s32 %s203, 1
      %p207 = scmp.eq.s32.totalorder %s22, 1
      %p208 = scmp.ne.s32.totalorder %s203, %s205
      %p209 = scmp.eq.s32.totalorder %s22, 0
      %p210 = por %p208, %p209
      %p211 = scmp.ne.s32.totalorder %s203, %s205
      %p212 = scmp.eq.s32.totalorder %s27, 1
      %p213 = por %p211, %p212
      %p214 = scmp.ne.s32.totalorder %s205, %s206
      %p215 = scmp.eq.s32.totalorder %s27, 0
      %p216 = por %p214, %p215
      %p217 = scmp.ne.s32.totalorder %s205, %s206
      %p218 = scmp.eq.s32.totalorder %s28, 1
      %p219 = por %p217, %p218
      %p221 = scmp.ne.s32.totalorder %s206, %s220
      %p222 = scmp.eq.s32.totalorder %s28, 0
      %p223 = por %p221, %p222
      %s225 = sadd.s32 %s224, 1
      %p228 = scmp.eq.s32.totalorder %s22, 1
      %p229 = scmp.ne.s32.totalorder %s224, %s226
      %p230 = scmp.eq.s32.totalorder %s22, 0
      %p231 = por %p229, %p230
      %p232 = scmp.ne.s32.totalorder %s224, %s226
      %p233 = scmp.eq.s32.totalorder %s27, 1
      %p234 = por %p232, %p233
      %p235 = scmp.ne.s32.totalorder %s226, %s227
      %p236 = scmp.eq.s32.totalorder %s27, 0
      %p237 = por %p235, %p236
      %p238 = scmp.ne.s32.totalorder %s226, %s227
      %p239 = scmp.eq.s32.totalorder %s28, 1
      %p240 = por %p238, %p239
      %p242 = scmp.ne.s32.totalorder %s227, %s241
      %p243 = scmp.eq.s32.totalorder %s28, 0
      %p244 = por %p242, %p243
      %s246 = sadd.s32 %s245, 1
      %p249 = scmp.eq.s32.totalorder %s22, 1
      %p250 = scmp.ne.s32.totalorder %s245, %s247
      %p251 = scmp.eq.s32.totalorder %s22, 0
      %p252 = por %p250, %p251
      %p253 = scmp.ne.s32.totalorder %s245, %s247
      %p254 = scmp.eq.s32.totalorder %s27, 1
      %p255 = por %p253, %p254
      %p256 = scmp.ne.s32.totalorder %s247, %s248
      %p257 = scmp.eq.s32.totalorder %s27, 0
      %p258 = por %p256, %p257
      %p259 = scmp.ne.s32.totalorder %s247, %s248
      %p260 = scmp.eq.s32.totalorder %s28, 1
      %p261 = por %p259, %p260
      %p263 = scmp.ne.s32.totalorder %s248, %s262
      %p264 = scmp.eq.s32.totalorder %s28, 0
      %p265 = por %p263, %p264
      %s267 = sadd.s32 %s266, 1
      %p270 = scmp.eq.s32.totalorder %s22, 1
      %p271 = scmp.ne.s32.totalorder %s266, %s268
      %p272 = scmp.eq.s32.totalorder %s22, 0
      %p273 = por %p271, %p272
      %p274 = scmp.ne.s32.totalorder %s266, %s268
      %p275 = scmp.eq.s32.totalorder %s27, 1
      %p276 = por %p274, %p275
      %p277 = scmp.ne.s32.totalorder %s268, %s269
      %p278 = scmp.eq.s32.totalorder %s27, 0
      %p279 = por %p277, %p278
      %p280 = scmp.ne.s32.totalorder %s268, %s269
      %p281 = scmp.eq.s32.totalorder %s28, 1
      %p282 = por %p280, %p281
      %p284 = scmp.ne.s32.totalorder %s269, %s283
      %p285 = scmp.eq.s32.totalorder %s28, 0
      %p286 = por %p284, %p285
      %s288 = sadd.s32 %s287, 1
      %p291 = scmp.eq.s32.totalorder %s22, 1
      %p292 = scmp.ne.s32.totalorder %s287, %s289
      %p293 = scmp.eq.s32.totalorder %s22, 0
      %p294 = por %p292, %p293
      %p295 = scmp.ne.s32.totalorder %s287, %s289
      %p296 = scmp.eq.s32.totalorder %s27, 1
      %p297 = por %p295, %p296
      %p298 = scmp.ne.s32.totalorder %s289, %s290
      %p299 = scmp.eq.s32.totalorder %s27, 0
      %p300 = por %p298, %p299
      %p301 = scmp.ne.s32.totalorder %s289, %s290
      %p302 = scmp.eq.s32.totalorder %s28, 1
      %p303 = por %p301, %p302
      %p305 = scmp.ne.s32.totalorder %s290, %s304
      %p306 = scmp.eq.s32.totalorder %s28, 0
      %p307 = por %p305, %p306
      %s308 = ssub.s32 %s22, %s29
      %p309 = scmp.eq.s32.totalorder %s308, 0
      %s311 = sadd.s32 %s310, 1
      %s312 = scalar_select %p309, %s310, %s311
      %p315 = pneg %p309
      %p316 = scmp.eq.s32.totalorder %s22, 1
      %p317 = por %p315, %p316
      %p318 = scmp.ne.s32.totalorder %s310, %s313
      %p319 = scmp.eq.s32.totalorder %s22, 0
      %p320 = por %p318, %p319
      %p321 = scmp.ne.s32.totalorder %s310, %s313
      %p322 = scmp.eq.s32.totalorder %s27, 1
      %p323 = por %p321, %p322
      %p324 = scmp.ne.s32.totalorder %s313, %s314
      %p325 = scmp.eq.s32.totalorder %s27, 0
      %p326 = por %p324, %p325
      %p327 = scmp.ne.s32.totalorder %s313, %s314
      %p328 = scmp.eq.s32.totalorder %s28, 1
      %p329 = por %p327, %p328
      %p331 = scmp.ne.s32.totalorder %s314, %s330
      %p332 = scmp.eq.s32.totalorder %s28, 0
      %p333 = por %p331, %p332
      %p334 = scmp.le.s32.totalorder 1, %s22
      %p335 = scmp.lt.s32.totalorder %s22, 3
      %p336 = pnand %p334, %p335
      %p337 = pneg %p336
      // Predicated region
      $region9: #{_lambda_.1} parent=5 // pred_check
        _
      $region10: #{_lambda_.1} parent=5 // pred_check_branch
        %339 = sbr.rel (%p336) target = $region12
      $region11: #{_lambda_.1} parent=5 // pred_region
        %s340 = ssub.s32 %s22, 1
        // Predicated region
        $region13: #{_lambda_.1} parent=11 // pred_check
          %p341 = pneg %p69
        $region14: #{_lambda_.1} parent=11 // pred_check_branch
          %343 = sbr.rel (%p341) target = $region16
        $region15: #{_lambda_.1} parent=11 // pred_region
          _
        $region16: #{_lambda_.1} parent=11 // pred_fallthru
          _
        // Predicated region
        $region17: #{_lambda_.1} parent=11 // pred_check
          %p344 = pneg %p90
        $region18: #{_lambda_.1} parent=11 // pred_check_branch
          %346 = sbr.rel (%p344) target = $region20
        $region19: #{_lambda_.1} parent=11 // pred_region
          _
        $region20: #{_lambda_.1} parent=11 // pred_fallthru
          _
        // Predicated region
        $region21: #{_lambda_.1} parent=11 // pred_check
          %p347 = pneg %p111
        $region22: #{_lambda_.1} parent=11 // pred_check_branch
          %349 = sbr.rel (%p347) target = $region24
        $region23: #{_lambda_.1} parent=11 // pred_region
          _
        $region24: #{_lambda_.1} parent=11 // pred_fallthru
          _
        // Predicated region
        $region25: #{_lambda_.1} parent=11 // pred_check
          %p350 = pneg %p132
        $region26: #{_lambda_.1} parent=11 // pred_check_branch
          %352 = sbr.rel (%p350) target = $region28
        $region27: #{_lambda_.1} parent=11 // pred_region
          _
        $region28: #{_lambda_.1} parent=11 // pred_fallthru
          _
        // Predicated region
        $region29: #{_lambda_.1} parent=11 // pred_check
          %p353 = pneg %p153
        $region30: #{_lambda_.1} parent=11 // pred_check_branch
          %355 = sbr.rel (%p353) target = $region32
        $region31: #{_lambda_.1} parent=11 // pred_region
          _
        $region32: #{_lambda_.1} parent=11 // pred_fallthru
          _
        // Predicated region
        $region33: #{_lambda_.1} parent=11 // pred_check
          %p356 = pneg %p174
        $region34: #{_lambda_.1} parent=11 // pred_check_branch
          %358 = sbr.rel (%p356) target = $region36
        $region35: #{_lambda_.1} parent=11 // pred_region
          _
        $region36: #{_lambda_.1} parent=11 // pred_fallthru
          _
        // Predicated region
        $region37: #{_lambda_.1} parent=11 // pred_check
          %p359 = pneg %p195
        $region38: #{_lambda_.1} parent=11 // pred_check_branch
          %361 = sbr.rel (%p359) target = $region40
        $region39: #{_lambda_.1} parent=11 // pred_region
          _
        $region40: #{_lambda_.1} parent=11 // pred_fallthru
          _
        // Predicated region
        $region41: #{_lambda_.1} parent=11 // pred_check
          %p362 = pneg %p216
        $region42: #{_lambda_.1} parent=11 // pred_check_branch
          %364 = sbr.rel (%p362) target = $region44
        $region43: #{_lambda_.1} parent=11 // pred_region
          _
        $region44: #{_lambda_.1} parent=11 // pred_fallthru
          _
        // Predicated region
        $region45: #{_lambda_.1} parent=11 // pred_check
          %p365 = pneg %p237
        $region46: #{_lambda_.1} parent=11 // pred_check_branch
          %367 = sbr.rel (%p365) target = $region48
        $region47: #{_lambda_.1} parent=11 // pred_region
          _
        $region48: #{_lambda_.1} parent=11 // pred_fallthru
          _
        // Predicated region
        $region49: #{_lambda_.1} parent=11 // pred_check
          %p368 = pneg %p258
        $region50: #{_lambda_.1} parent=11 // pred_check_branch
          %370 = sbr.rel (%p368) target = $region52
        $region51: #{_lambda_.1} parent=11 // pred_region
          _
        $region52: #{_lambda_.1} parent=11 // pred_fallthru
          _
        // Predicated region
        $region53: #{_lambda_.1} parent=11 // pred_check
          %p371 = pneg %p279
        $region54: #{_lambda_.1} parent=11 // pred_check_branch
          %373 = sbr.rel (%p371) target = $region56
        $region55: #{_lambda_.1} parent=11 // pred_region
          _
        $region56: #{_lambda_.1} parent=11 // pred_fallthru
          _
        // Predicated region
        $region57: #{_lambda_.1} parent=11 // pred_check
          %p374 = pneg %p300
        $region58: #{_lambda_.1} parent=11 // pred_check_branch
          %376 = sbr.rel (%p374) target = $region60
        $region59: #{_lambda_.1} parent=11 // pred_region
          _
        $region60: #{_lambda_.1} parent=11 // pred_fallthru
          _
      $region12: #{_lambda_.1} parent=5 // pred_fallthru
        _
      %p377 = scmp.lt.s32.totalorder %s22, 2
      // Predicated region
      $region61: #{_lambda_.1} parent=5 // pred_check
        %p378 = pneg %p377
      $region62: #{_lambda_.1} parent=5 // pred_check_branch
        %380 = sbr.rel (%p378) target = $region64
      $region63: #{_lambda_.1} parent=5 // pred_region
        // Predicated region
        $region65: #{_lambda_.1} parent=63 // pred_check
          %p381 = pneg %p42
        $region66: #{_lambda_.1} parent=63 // pred_check_branch
          %383 = sbr.rel (%p381) target = $region68
        $region67: #{_lambda_.1} parent=63 // pred_region
          %s384 = smul.u32 16, %s22
          %p385 = scmp.lt.s32.totalorder %s384, 31
          %s386 = scalar_select %p385, %s384, 31
          %s387 = smul.addr %s386, 8
          %s388 = scalar_lea.vmem %s0, %s387
          %s389 = smul.u32 16, %s22
        $region68: #{_lambda_.1} parent=63 // pred_fallthru
          _
      $region64: #{_lambda_.1} parent=5 // pred_fallthru
        _
      %p390 = scmp.le.s32.totalorder 1, %s22
      %p391 = scmp.lt.s32.totalorder %s22, 3
      %p392 = pnand %p390, %p391
      %p393 = pneg %p392
      // Predicated region
      $region69: #{_lambda_.1} parent=5 // pred_check
        _
      $region70: #{_lambda_.1} parent=5 // pred_check_branch
        %395 = sbr.rel (%p392) target = $region72
      $region71: #{_lambda_.1} parent=5 // pred_region
        %s396 = ssub.s32 %s22, 1
        %s397 = smul.u32 16, %s27
        %p398 = scmp.lt.s32.totalorder %s397, 31
        %s399 = scalar_select %p398, %s397, 31
        %s400 = smul.addr %s399, 8
        %s401 = scalar_lea.vmem %s0, %s400
        %p402 = pneg %p48
        %p403 = pneg %p45
        %p404 = pneg %p69
        %p405 = pneg %p66
        %p406 = pneg %p90
        %p407 = pneg %p87
        %p408 = pneg %p111
        %p409 = pneg %p108
        %p410 = pneg %p132
        %p411 = pneg %p129
        %p412 = pneg %p153
        %p413 = pneg %p150
        %p414 = pneg %p174
        %p415 = pneg %p171
        %p416 = pneg %p195
        %p417 = pneg %p192
        %p418 = pneg %p216
        %p419 = pneg %p213
        %p420 = pneg %p237
        %p421 = pneg %p234
        %p422 = pneg %p258
        %p423 = pneg %p255
        %p424 = pneg %p279
        %p425 = pneg %p276
        %p426 = pneg %p300
        %p427 = pneg %p297
        %p428 = pneg %p326
        %p429 = pneg %p323
        %s430 = sand.u32 %s313, 1
        %s431 = scalar_lea.sflag [#allocation3], %s430
        %s432 = sand.u32 %s313, 1
        %s433 = smul.addr %s432, 64
        %s434 = scalar_lea.vmem [#allocation2], %s433
        %s435 = smul.u32 16, %s27
        %p436 = scmp.lt.s32.totalorder %s435, 31
        %s437 = scalar_select %p436, %s435, 31
        %s438 = smul.addr %s437, 8
        %s439 = scalar_lea.vmem %s0, %s438
        %s440 = smul.u32 16, %s27
        %s441 = smul.u32 16, %s27
        %v443 = vld [vmem:[%s439] sm:$0xff]
        %v444 = vld [vmem:[%s439 + $0x8] sm:$0xff]
        %v445 = vld [vmem:[%s439 + $0x10] sm:$0xff]
        %v446 = vld [vmem:[%s439 + $0x18] sm:$0xff]
        %v447 = vld [vmem:[%s439 + $0x20] sm:$0xff]
        %v448 = vld [vmem:[%s439 + $0x28] sm:$0xff]
        %v449 = vld [vmem:[%s439 + $0x30] sm:$0xff]
        %v450 = vld [vmem:[%s439 + $0x38] sm:$0xff]
        %v451 = vld [vmem:[%s439 + $0x40] sm:$0xff]
        %v452 = vld [vmem:[%s439 + $0x48] sm:$0xff]
        %v453 = vld [vmem:[%s439 + $0x50] sm:$0xff]
        %v454 = vld [vmem:[%s439 + $0x58] sm:$0xff]
        %v455 = vld [vmem:[%s439 + $0x60] sm:$0xff]
        %v456 = vld [vmem:[%s439 + $0x68] sm:$0xff]
        %v457 = vld [vmem:[%s439 + $0x70] sm:$0xff]
        %v458 = vld [vmem:[%s439 + $0x78] sm:$0xff]
        %v459 = vpack.c.bf16 %v444, %v443
        %v460 = vpack.c.bf16 %v446, %v445
        %v461 = vpack.c.bf16 %v448, %v447
        %v462 = vpack.c.bf16 %v450, %v449
        %v463 = vpack.c.bf16 %v452, %v451
        %v464 = vpack.c.bf16 %v454, %v453
        %v465 = vpack.c.bf16 %v456, %v455
        %v466 = vpack.c.bf16 %v458, %v457
        %v467 = vld [vmem:[%s1] sm:$0xf]
        %v468 = vld [vmem:[%s1 + $0x4] sm:$0xf]
        %v469 = vld [vmem:[%s1 + $0x8] sm:$0xf]
        %v470 = vld [vmem:[%s1 + $0xc] sm:$0xf]
        %v471 = vld [vmem:[%s2] sm:$0x1]
        %v473 = vlaneseq
        %v474 = vshrl.u32 %v473, 7
        %v475 = vsub.s32 0, %v474
        %v476 = vrot.slane %v471, %v475
        %v482 = vunpack.c.l.b16 %v467
        %v483 = vunpack.c.l.b16 %v468
        %v484 = vunpack.c.l.b16 %v469
        %v485 = vunpack.c.l.b16 %v470
        %v486 = vpack.c.b16 %v483, %v482
        %v487 = vpack.c.b16 %v485, %v484
        %vm490 = vcmask 261120
        %v492 = vsel %vm490, %v459, 0
        %v495 = vsel %vm490, %v460, 0
        %v498 = vsel %vm490, %v461, 0
        %v501 = vsel %vm490, %v462, 0
        %v504 = vsel %vm490, %v463, 0
        %v507 = vsel %vm490, %v464, 0
        %v510 = vsel %vm490, %v465, 0
        %v513 = vsel %vm490, %v466, 0
        %515 = vmatprep.subr.bf16.mxu0 0
        %516 = vmatpush1.bf16.msra.mxu0 %v486
        %517 = vmatprep.subr.bf16.mxu0 0
        %518 = vmatpush1.bf16.msra.mxu0 %v487
        %519 = vmatprep.subr.bf16.mxu0 0
        %520 = vmatpush1.bf16.msra.mxu0 0
        %521 = vmatprep.subr.bf16.mxu0 0
        %522 = vmatpush1.bf16.msra.mxu0 0
        %523 = vmatprep.subr.bf16.mxu0 0
        %524 = vmatpush1.bf16.msra.mxu0 0
        %525 = vmatprep.subr.bf16.mxu0 0
        %526 = vmatpush1.bf16.msra.mxu0 0
        %527 = vmatprep.subr.bf16.mxu0 0
        %528 = vmatpush1.bf16.msra.mxu0 0
        %529 = vmatprep.subr.bf16.mxu0 0
        %530 = vmatpush1.bf16.msra.mxu0 0
        %531 = vmatprep.subr.bf16.mxu0 0
        %532 = vmatpush1.bf16.msra.mxu0 0
        %533 = vmatprep.subr.bf16.mxu0 0
        %534 = vmatpush1.bf16.msra.mxu0 0
        %535 = vmatprep.subr.bf16.mxu0 0
        %536 = vmatpush1.bf16.msra.mxu0 0
        %537 = vmatprep.subr.bf16.mxu0 0
        %538 = vmatpush1.bf16.msra.mxu0 0
        %539 = vmatprep.subr.bf16.mxu0 0
        %540 = vmatpush1.bf16.msra.mxu0 0
        %541 = vmatprep.subr.bf16.mxu0 0
        %542 = vmatpush1.bf16.msra.mxu0 0
        %543 = vmatprep.subr.bf16.mxu0 0
        %544 = vmatpush1.bf16.msra.mxu0 0
        %545 = vmatprep.subr.bf16.mxu0 0
        %546 = vmatpush1.bf16.msra.mxu0 0
        %547 = vmatprep.mubr.bf16.mxu0 0
        %548 = vmatmul.mubr.bf16.gmra.mrb[0].mxu0 %v492
        %v549 = vpop.f32.mrb[0].mxu0
        %v550 = vadd.f32 %v476, %v549
        %v551 = vpop.f32.mrb[0].mxu0
        %v552 = vpop.f32.mrb[0].mxu0
        %v553 = vadd.f32 %v476, %v552
        %v554 = vpop.f32.mrb[0].mxu0
        %555 = vmatprep.mubr.bf16.mxu0 0
        %556 = vmatmul.mubr.bf16.gmra.mrb[0].mxu0 %v495
        %v557 = vpop.f32.mrb[0].mxu0
        %v558 = vadd.f32 %v476, %v557
        %v559 = vpop.f32.mrb[0].mxu0
        %v560 = vpop.f32.mrb[0].mxu0
        %v561 = vadd.f32 %v476, %v560
        %v562 = vpop.f32.mrb[0].mxu0
        %563 = vmatprep.mubr.bf16.mxu0 0
        %564 = vmatmul.mubr.bf16.gmra.mrb[0].mxu0 %v498
        %v565 = vpop.f32.mrb[0].mxu0
        %v566 = vadd.f32 %v476, %v565
        %v567 = vpop.f32.mrb[0].mxu0
        %v568 = vpop.f32.mrb[0].mxu0
        %v569 = vadd.f32 %v476, %v568
        %v570 = vpop.f32.mrb[0].mxu0
        %571 = vmatprep.mubr.bf16.mxu0 0
        %572 = vmatmul.mubr.bf16.gmra.mrb[0].mxu0 %v501
        %v573 = vpop.f32.mrb[0].mxu0
        %v574 = vadd.f32 %v476, %v573
        %v575 = vpop.f32.mrb[0].mxu0
        %v576 = vpop.f32.mrb[0].mxu0
        %v577 = vadd.f32 %v476, %v576
        %v578 = vpop.f32.mrb[0].mxu0
        %579 = vmatprep.mubr.bf16.mxu0 0
        %580 = vmatmul.mubr.bf16.gmra.mrb[0].mxu0 %v504
        %v581 = vpop.f32.mrb[0].mxu0
        %v582 = vadd.f32 %v476, %v581
        %v583 = vpop.f32.mrb[0].mxu0
        %v584 = vpop.f32.mrb[0].mxu0
        %v585 = vadd.f32 %v476, %v584
        %v586 = vpop.f32.mrb[0].mxu0
        %587 = vmatprep.mubr.bf16.mxu0 0
        %588 = vmatmul.mubr.bf16.gmra.mrb[0].mxu0 %v507
        %v589 = vpop.f32.mrb[0].mxu0
        %v590 = vadd.f32 %v476, %v589
        %v591 = vpop.f32.mrb[0].mxu0
        %v592 = vpop.f32.mrb[0].mxu0
        %v593 = vadd.f32 %v476, %v592
        %v594 = vpop.f32.mrb[0].mxu0
        %595 = vmatprep.mubr.bf16.mxu0 0
        %596 = vmatmul.mubr.bf16.gmra.mrb[0].mxu0 %v510
        %v597 = vpop.f32.mrb[0].mxu0
        %v598 = vadd.f32 %v476, %v597
        %v599 = vpop.f32.mrb[0].mxu0
        %v600 = vpop.f32.mrb[0].mxu0
        %v601 = vadd.f32 %v476, %v600
        %v602 = vpop.f32.mrb[0].mxu0
        %603 = vmatprep.mubr.bf16.mxu0 0
        %604 = vmatmul.mubr.bf16.gmra.mrb[0].mxu0 %v513
        %v605 = vpop.f32.mrb[0].mxu0
        %v606 = vadd.f32 %v476, %v605
        %v607 = vpop.f32.mrb[0].mxu0
        %v608 = vpop.f32.mrb[0].mxu0
        %v609 = vadd.f32 %v476, %v608
        %v610 = vpop.f32.mrb[0].mxu0
        %611 = vdwg.mxu0
        %v612 = vmul.f32 %v550, 0.2
        %v613 = vmul.f32 %v553, 0.2
        %v614 = vmul.f32 %v558, 0.2
        %v615 = vmul.f32 %v561, 0.2
        %v616 = vmul.f32 %v566, 0.2
        %v617 = vmul.f32 %v569, 0.2
        %v618 = vmul.f32 %v574, 0.2
        %v619 = vmul.f32 %v577, 0.2
        %v620 = vmul.f32 %v582, 0.2
        %v621 = vmul.f32 %v585, 0.2
        %v622 = vmul.f32 %v590, 0.2
        %v623 = vmul.f32 %v593, 0.2
        %v624 = vmul.f32 %v598, 0.2
        %v625 = vmul.f32 %v601, 0.2
        %v626 = vmul.f32 %v606, 0.2
        %v627 = vmul.f32 %v609, 0.2
        %v628 = vmax.f32 %v550, %v612
        %v629 = vmax.f32 %v553, %v613
        %v630 = vmax.f32 %v558, %v614
        %v631 = vmax.f32 %v561, %v615
        %v632 = vmax.f32 %v566, %v616
        %v633 = vmax.f32 %v569, %v617
        %v634 = vmax.f32 %v574, %v618
        %v635 = vmax.f32 %v577, %v619
        %v636 = vmax.f32 %v582, %v620
        %v637 = vmax.f32 %v585, %v621
        %v638 = vmax.f32 %v590, %v622
        %v639 = vmax.f32 %v593, %v623
        %v640 = vmax.f32 %v598, %v624
        %v641 = vmax.f32 %v601, %v625
        %v642 = vmax.f32 %v606, %v626
        %v643 = vmax.f32 %v609, %v627
        %v644 = vpack.c.bf16 %v629, %v628
        %v645 = vpack.c.bf16 %v631, %v630
        %v646 = vpack.c.bf16 %v633, %v632
        %v647 = vpack.c.bf16 %v635, %v634
        %v648 = vpack.c.bf16 %v637, %v636
        %v649 = vpack.c.bf16 %v639, %v638
        %v650 = vpack.c.bf16 %v641, %v640
        %v651 = vpack.c.bf16 %v643, %v642
        %v652 = vld [vmem:[%s3] sm:$0xf]
        %v653 = vld [vmem:[%s3 + $0x4] sm:$0xf]
        %v654 = vld [vmem:[%s3 + $0x8] sm:$0xf]
        %v655 = vld [vmem:[%s3 + $0xc] sm:$0xf]
        %v656 = vld [vmem:[%s3 + $0x10] sm:$0xf]
        %v657 = vld [vmem:[%s3 + $0x14] sm:$0xf]
        %v658 = vld [vmem:[%s3 + $0x18] sm:$0xf]
        %v659 = vld [vmem:[%s3 + $0x1c] sm:$0xf]
        %v660 = vld [vmem:[%s3 + $0x20] sm:$0xf]
        %v661 = vld [vmem:[%s3 + $0x24] sm:$0xf]
        %v662 = vld [vmem:[%s3 + $0x28] sm:$0xf]
        %v663 = vld [vmem:[%s3 + $0x2c] sm:$0xf]
        %v664 = vld [vmem:[%s3 + $0x30] sm:$0xf]
        %v665 = vld [vmem:[%s3 + $0x34] sm:$0xf]
        %v666 = vld [vmem:[%s3 + $0x38] sm:$0xf]
        %v667 = vld [vmem:[%s3 + $0x3c] sm:$0xf]
        %v668 = vld [vmem:[%s4] sm:$0x1]
        %v670 = vlaneseq
        %v671 = vshrl.u32 %v670, 7
        %v672 = vsub.s32 0, %v671
        %v673 = vrot.slane %v668, %v672
        %v691 = vunpack.c.l.b16 %v652
        %v692 = vunpack.c.l.b16 %v653
        %v693 = vunpack.c.l.b16 %v654
        %v694 = vunpack.c.l.b16 %v655
        %v695 = vunpack.c.l.b16 %v656
        %v696 = vunpack.c.l.b16 %v657
        %v697 = vunpack.c.l.b16 %v658
        %v698 = vunpack.c.l.b16 %v659
        %v699 = vunpack.c.l.b16 %v660
        %v700 = vunpack.c.l.b16 %v661
        %v701 = vunpack.c.l.b16 %v662
        %v702 = vunpack.c.l.b16 %v663
        %v703 = vunpack.c.l.b16 %v664
        %v704 = vunpack.c.l.b16 %v665
        %v705 = vunpack.c.l.b16 %v666
        %v706 = vunpack.c.l.b16 %v667
        %v707 = vpack.c.b16 %v692, %v691
        %v708 = vpack.c.b16 %v694, %v693
        %v709 = vpack.c.b16 %v696, %v695
        %v710 = vpack.c.b16 %v698, %v697
        %v711 = vpack.c.b16 %v700, %v699
        %v712 = vpack.c.b16 %v702, %v701
        %v713 = vpack.c.b16 %v704, %v703
        %v714 = vpack.c.b16 %v706, %v705
        %723 = vmatprep.subr.bf16.mxu0 0
        %724 = vmatpush1.bf16.msra.mxu0 %v707
        %725 = vmatprep.subr.bf16.mxu0 0
        %726 = vmatpush1.bf16.msra.mxu0 %v708
        %727 = vmatprep.subr.bf16.mxu0 0
        %728 = vmatpush1.bf16.msra.mxu0 %v709
        %729 = vmatprep.subr.bf16.mxu0 0
        %730 = vmatpush1.bf16.msra.mxu0 %v710
        %731 = vmatprep.subr.bf16.mxu0 0
        %732 = vmatpush1.bf16.msra.mxu0 %v711
        %733 = vmatprep.subr.bf16.mxu0 0
        %734 = vmatpush1.bf16.msra.mxu0 %v712
        %735 = vmatprep.subr.bf16.mxu0 0
        %736 = vmatpush1.bf16.msra.mxu0 %v713
        %737 = vmatprep.subr.bf16.mxu0 0
        %738 = vmatpush1.bf16.msra.mxu0 %v714
        %739 = vmatprep.subr.bf16.mxu0 0
        %740 = vmatpush1.bf16.msra.mxu0 0
        %741 = vmatprep.subr.bf16.mxu0 0
        %742 = vmatpush1.bf16.msra.mxu0 0
        %743 = vmatprep.subr.bf16.mxu0 0
        %744 = vmatpush1.bf16.msra.mxu0 0
        %745 = vmatprep.subr.bf16.mxu0 0
        %746 = vmatpush1.bf16.msra.mxu0 0
        %747 = vmatprep.subr.bf16.mxu0 0
        %748 = vmatpush1.bf16.msra.mxu0 0
        %749 = vmatprep.subr.bf16.mxu0 0
        %750 = vmatpush1.bf16.msra.mxu0 0
        %751 = vmatprep.subr.bf16.mxu0 0
        %752 = vmatpush1.bf16.msra.mxu0 0
        %753 = vmatprep.subr.bf16.mxu0 0
        %754 = vmatpush1.bf16.msra.mxu0 0
        %755 = vmatprep.mubr.bf16.mxu0 0
        %756 = vmatmul.mubr.bf16.gmra.mrb[0].mxu0 %v644
        %v757 = vpop.f32.mrb[0].mxu0
        %v758 = vadd.f32 %v673, %v757
        %v759 = vpop.f32.mrb[0].mxu0
        %v760 = vpop.f32.mrb[0].mxu0
        %v761 = vadd.f32 %v673, %v760
        %v762 = vpop.f32.mrb[0].mxu0
        %763 = vmatprep.mubr.bf16.mxu0 0
        %764 = vmatmul.mubr.bf16.gmra.mrb[0].mxu0 %v645
        %v765 = vpop.f32.mrb[0].mxu0
        %v766 = vadd.f32 %v673, %v765
        %v767 = vpop.f32.mrb[0].mxu0
        %v768 = vpop.f32.mrb[0].mxu0
        %v769 = vadd.f32 %v673, %v768
        %v770 = vpop.f32.mrb[0].mxu0
        %771 = vmatprep.mubr.bf16.mxu0 0
        %772 = vmatmul.mubr.bf16.gmra.mrb[0].mxu0 %v646
        %v773 = vpop.f32.mrb[0].mxu0
        %v774 = vadd.f32 %v673, %v773
        %v775 = vpop.f32.mrb[0].mxu0
        %v776 = vpop.f32.mrb[0].mxu0
        %v777 = vadd.f32 %v673, %v776
        %v778 = vpop.f32.mrb[0].mxu0
        %779 = vmatprep.mubr.bf16.mxu0 0
        %780 = vmatmul.mubr.bf16.gmra.mrb[0].mxu0 %v647
        %v781 = vpop.f32.mrb[0].mxu0
        %v782 = vadd.f32 %v673, %v781
        %v783 = vpop.f32.mrb[0].mxu0
        %v784 = vpop.f32.mrb[0].mxu0
        %v785 = vadd.f32 %v673, %v784
        %v786 = vpop.f32.mrb[0].mxu0
        %787 = vmatprep.mubr.bf16.mxu0 0
        %788 = vmatmul.mubr.bf16.gmra.mrb[0].mxu0 %v648
        %v789 = vpop.f32.mrb[0].mxu0
        %v790 = vadd.f32 %v673, %v789
        %v791 = vpop.f32.mrb[0].mxu0
        %v792 = vpop.f32.mrb[0].mxu0
        %v793 = vadd.f32 %v673, %v792
        %v794 = vpop.f32.mrb[0].mxu0
        %795 = vmatprep.mubr.bf16.mxu0 0
        %796 = vmatmul.mubr.bf16.gmra.mrb[0].mxu0 %v649
        %v797 = vpop.f32.mrb[0].mxu0
        %v798 = vadd.f32 %v673, %v797
        %v799 = vpop.f32.mrb[0].mxu0
        %v800 = vpop.f32.mrb[0].mxu0
        %v801 = vadd.f32 %v673, %v800
        %v802 = vpop.f32.mrb[0].mxu0
        %803 = vmatprep.mubr.bf16.mxu0 0
        %804 = vmatmul.mubr.bf16.gmra.mrb[0].mxu0 %v650
        %v805 = vpop.f32.mrb[0].mxu0
        %v806 = vadd.f32 %v673, %v805
        %v807 = vpop.f32.mrb[0].mxu0
        %v808 = vpop.f32.mrb[0].mxu0
        %v809 = vadd.f32 %v673, %v808
        %v810 = vpop.f32.mrb[0].mxu0
        %811 = vmatprep.mubr.bf16.mxu0 0
        %812 = vmatmul.mubr.bf16.gmra.mrb[0].mxu0 %v651
        %v813 = vpop.f32.mrb[0].mxu0
        %v814 = vadd.f32 %v673, %v813
        %v815 = vpop.f32.mrb[0].mxu0
        %v816 = vpop.f32.mrb[0].mxu0
        %v817 = vadd.f32 %v673, %v816
        %v818 = vpop.f32.mrb[0].mxu0
        %819 = vdwg.mxu0
        %v820 = vmul.f32 %v758, 0.2
        %v821 = vmul.f32 %v761, 0.2
        %v822 = vmul.f32 %v766, 0.2
        %v823 = vmul.f32 %v769, 0.2
        %v824 = vmul.f32 %v774, 0.2
        %v825 = vmul.f32 %v777, 0.2
        %v826 = vmul.f32 %v782, 0.2
        %v827 = vmul.f32 %v785, 0.2
        %v828 = vmul.f32 %v790, 0.2
        %v829 = vmul.f32 %v793, 0.2
        %v830 = vmul.f32 %v798, 0.2
        %v831 = vmul.f32 %v801, 0.2
        %v832 = vmul.f32 %v806, 0.2
        %v833 = vmul.f32 %v809, 0.2
        %v834 = vmul.f32 %v814, 0.2
        %v835 = vmul.f32 %v817, 0.2
        %v836 = vmax.f32 %v758, %v820
        %v837 = vmax.f32 %v761, %v821
        %v838 = vmax.f32 %v766, %v822
        %v839 = vmax.f32 %v769, %v823
        %v840 = vmax.f32 %v774, %v824
        %v841 = vmax.f32 %v777, %v825
        %v842 = vmax.f32 %v782, %v826
        %v843 = vmax.f32 %v785, %v827
        %v844 = vmax.f32 %v790, %v828
        %v845 = vmax.f32 %v793, %v829
        %v846 = vmax.f32 %v798, %v830
        %v847 = vmax.f32 %v801, %v831
        %v848 = vmax.f32 %v806, %v832
        %v849 = vmax.f32 %v809, %v833
        %v850 = vmax.f32 %v814, %v834
        %v851 = vmax.f32 %v817, %v835
        %v852 = vpack.c.bf16 %v837, %v836
        %v853 = vpack.c.bf16 %v839, %v838
        %v854 = vpack.c.bf16 %v841, %v840
        %v855 = vpack.c.bf16 %v843, %v842
        %v856 = vpack.c.bf16 %v845, %v844
        %v857 = vpack.c.bf16 %v847, %v846
        %v858 = vpack.c.bf16 %v849, %v848
        %v859 = vpack.c.bf16 %v851, %v850
        %v860 = vld [vmem:[%s5] sm:$0xf]
        %v861 = vld [vmem:[%s5 + $0x4] sm:$0xf]
        %v862 = vld [vmem:[%s5 + $0x8] sm:$0xf]
        %v863 = vld [vmem:[%s5 + $0xc] sm:$0xf]
        %v864 = vld [vmem:[%s5 + $0x10] sm:$0xf]
        %v865 = vld [vmem:[%s5 + $0x14] sm:$0xf]
        %v866 = vld [vmem:[%s5 + $0x18] sm:$0xf]
        %v867 = vld [vmem:[%s5 + $0x1c] sm:$0xf]
        %v868 = vld [vmem:[%s5 + $0x20] sm:$0xf]
        %v869 = vld [vmem:[%s5 + $0x24] sm:$0xf]
        %v870 = vld [vmem:[%s5 + $0x28] sm:$0xf]
        %v871 = vld [vmem:[%s5 + $0x2c] sm:$0xf]
        %v872 = vld [vmem:[%s5 + $0x30] sm:$0xf]
        %v873 = vld [vmem:[%s5 + $0x34] sm:$0xf]
        %v874 = vld [vmem:[%s5 + $0x38] sm:$0xf]
        %v875 = vld [vmem:[%s5 + $0x3c] sm:$0xf]
        %v876 = vld [vmem:[%s6] sm:$0x1]
        %v878 = vlaneseq
        %v879 = vshrl.u32 %v878, 7
        %v880 = vsub.s32 0, %v879
        %v881 = vrot.slane %v876, %v880
        %v899 = vunpack.c.l.b16 %v860
        %v900 = vunpack.c.l.b16 %v861
        %v901 = vunpack.c.l.b16 %v862
        %v902 = vunpack.c.l.b16 %v863
        %v903 = vunpack.c.l.b16 %v864
        %v904 = vunpack.c.l.b16 %v865
        %v905 = vunpack.c.l.b16 %v866
        %v906 = vunpack.c.l.b16 %v867
        %v907 = vunpack.c.l.b16 %v868
        %v908 = vunpack.c.l.b16 %v869
        %v909 = vunpack.c.l.b16 %v870
        %v910 = vunpack.c.l.b16 %v871
        %v911 = vunpack.c.l.b16 %v872
        %v912 = vunpack.c.l.b16 %v873
        %v913 = vunpack.c.l.b16 %v874
        %v914 = vunpack.c.l.b16 %v875
        %v915 = vpack.c.b16 %v900, %v899
        %v916 = vpack.c.b16 %v902, %v901
        %v917 = vpack.c.b16 %v904, %v903
        %v918 = vpack.c.b16 %v906, %v905
        %v919 = vpack.c.b16 %v908, %v907
        %v920 = vpack.c.b16 %v910, %v909
        %v921 = vpack.c.b16 %v912, %v911
        %v922 = vpack.c.b16 %v914, %v913
        %931 = vmatprep.subr.bf16.mxu0 0
        %932 = vmatpush1.bf16.msra.mxu0 %v915
        %933 = vmatprep.subr.bf16.mxu0 0
        %934 = vmatpush1.bf16.msra.mxu0 %v916
        %935 = vmatprep.subr.bf16.mxu0 0
        %936 = vmatpush1.bf16.msra.mxu0 %v917
        %937 = vmatprep.subr.bf16.mxu0 0
        %938 = vmatpush1.bf16.msra.mxu0 %v918
        %939 = vmatprep.subr.bf16.mxu0 0
        %940 = vmatpush1.bf16.msra.mxu0 %v919
        %941 = vmatprep.subr.bf16.mxu0 0
        %942 = vmatpush1.bf16.msra.mxu0 %v920
        %943 = vmatprep.subr.bf16.mxu0 0
        %944 = vmatpush1.bf16.msra.mxu0 %v921
        %945 = vmatprep.subr.bf16.mxu0 0
        %946 = vmatpush1.bf16.msra.mxu0 %v922
        %947 = vmatprep.subr.bf16.mxu0 0
        %948 = vmatpush1.bf16.msra.mxu0 0
        %949 = vmatprep.subr.bf16.mxu0 0
        %950 = vmatpush1.bf16.msra.mxu0 0
        %951 = vmatprep.subr.bf16.mxu0 0
        %952 = vmatpush1.bf16.msra.mxu0 0
        %953 = vmatprep.subr.bf16.mxu0 0
        %954 = vmatpush1.bf16.msra.mxu0 0
        %955 = vmatprep.subr.bf16.mxu0 0
        %956 = vmatpush1.bf16.msra.mxu0 0
        %957 = vmatprep.subr.bf16.mxu0 0
        %958 = vmatpush1.bf16.msra.mxu0 0
        %959 = vmatprep.subr.bf16.mxu0 0
        %960 = vmatpush1.bf16.msra.mxu0 0
        %961 = vmatprep.subr.bf16.mxu0 0
        %962 = vmatpush1.bf16.msra.mxu0 0
        %963 = vmatprep.mubr.bf16.mxu0 0
        %964 = vmatmul.mubr.bf16.gmra.mrb[0].mxu0 %v852
        %v965 = vpop.f32.mrb[0].mxu0
        %v966 = vadd.f32 %v881, %v965
        %v967 = vpop.f32.mrb[0].mxu0
        %v968 = vpop.f32.mrb[0].mxu0
        %v969 = vadd.f32 %v881, %v968
        %v970 = vpop.f32.mrb[0].mxu0
        %971 = vmatprep.mubr.bf16.mxu0 0
        %972 = vmatmul.mubr.bf16.gmra.mrb[0].mxu0 %v853
        %v973 = vpop.f32.mrb[0].mxu0
        %v974 = vadd.f32 %v881, %v973
        %v975 = vpop.f32.mrb[0].mxu0
        %v976 = vpop.f32.mrb[0].mxu0
        %v977 = vadd.f32 %v881, %v976
        %v978 = vpop.f32.mrb[0].mxu0
        %979 = vmatprep.mubr.bf16.mxu0 0
        %980 = vmatmul.mubr.bf16.gmra.mrb[0].mxu0 %v854
        %v981 = vpop.f32.mrb[0].mxu0
        %v982 = vadd.f32 %v881, %v981
        %v983 = vpop.f32.mrb[0].mxu0
        %v984 = vpop.f32.mrb[0].mxu0
        %v985 = vadd.f32 %v881, %v984
        %v986 = vpop.f32.mrb[0].mxu0
        %987 = vmatprep.mubr.bf16.mxu0 0
        %988 = vmatmul.mubr.bf16.gmra.mrb[0].mxu0 %v855
        %v989 = vpop.f32.mrb[0].mxu0
        %v990 = vadd.f32 %v881, %v989
        %v991 = vpop.f32.mrb[0].mxu0
        %v992 = vpop.f32.mrb[0].mxu0
        %v993 = vadd.f32 %v881, %v992
        %v994 = vpop.f32.mrb[0].mxu0
        %995 = vmatprep.mubr.bf16.mxu0 0
        %996 = vmatmul.mubr.bf16.gmra.mrb[0].mxu0 %v856
        %v997 = vpop.f32.mrb[0].mxu0
        %v998 = vadd.f32 %v881, %v997
        %v999 = vpop.f32.mrb[0].mxu0
        %v1000 = vpop.f32.mrb[0].mxu0
        %v1001 = vadd.f32 %v881, %v1000
        %v1002 = vpop.f32.mrb[0].mxu0
        %1003 = vmatprep.mubr.bf16.mxu0 0
        %1004 = vmatmul.mubr.bf16.gmra.mrb[0].mxu0 %v857
        %v1005 = vpop.f32.mrb[0].mxu0
        %v1006 = vadd.f32 %v881, %v1005
        %v1007 = vpop.f32.mrb[0].mxu0
        %v1008 = vpop.f32.mrb[0].mxu0
        %v1009 = vadd.f32 %v881, %v1008
        %v1010 = vpop.f32.mrb[0].mxu0
        %1011 = vmatprep.mubr.bf16.mxu0 0
        %1012 = vmatmul.mubr.bf16.gmra.mrb[0].mxu0 %v858
        %v1013 = vpop.f32.mrb[0].mxu0
        %v1014 = vadd.f32 %v881, %v1013
        %v1015 = vpop.f32.mrb[0].mxu0
        %v1016 = vpop.f32.mrb[0].mxu0
        %v1017 = vadd.f32 %v881, %v1016
        %v1018 = vpop.f32.mrb[0].mxu0
        %1019 = vmatprep.mubr.bf16.mxu0 0
        %1020 = vmatmul.mubr.bf16.gmra.mrb[0].mxu0 %v859
        %v1021 = vpop.f32.mrb[0].mxu0
        %v1022 = vadd.f32 %v881, %v1021
        %v1023 = vpop.f32.mrb[0].mxu0
        %v1024 = vpop.f32.mrb[0].mxu0
        %v1025 = vadd.f32 %v881, %v1024
        %v1026 = vpop.f32.mrb[0].mxu0
        %1027 = vdwg.mxu0
        %v1028 = vmul.f32 %v966, 0.2
        %v1029 = vmul.f32 %v969, 0.2
        %v1030 = vmul.f32 %v974, 0.2
        %v1031 = vmul.f32 %v977, 0.2
        %v1032 = vmul.f32 %v982, 0.2
        %v1033 = vmul.f32 %v985, 0.2
        %v1034 = vmul.f32 %v990, 0.2
        %v1035 = vmul.f32 %v993, 0.2
        %v1036 = vmul.f32 %v998, 0.2
        %v1037 = vmul.f32 %v1001, 0.2
        %v1038 = vmul.f32 %v1006, 0.2
        %v1039 = vmul.f32 %v1009, 0.2
        %v1040 = vmul.f32 %v1014, 0.2
        %v1041 = vmul.f32 %v1017, 0.2
        %v1042 = vmul.f32 %v1022, 0.2
        %v1043 = vmul.f32 %v1025, 0.2
        %v1044 = vmax.f32 %v966, %v1028
        %v1045 = vmax.f32 %v969, %v1029
        %v1046 = vmax.f32 %v974, %v1030
        %v1047 = vmax.f32 %v977, %v1031
        %v1048 = vmax.f32 %v982, %v1032
        %v1049 = vmax.f32 %v985, %v1033
        %v1050 = vmax.f32 %v990, %v1034
        %v1051 = vmax.f32 %v993, %v1035
        %v1052 = vmax.f32 %v998, %v1036
        %v1053 = vmax.f32 %v1001, %v1037
        %v1054 = vmax.f32 %v1006, %v1038
        %v1055 = vmax.f32 %v1009, %v1039
        %v1056 = vmax.f32 %v1014, %v1040
        %v1057 = vmax.f32 %v1017, %v1041
        %v1058 = vmax.f32 %v1022, %v1042
        %v1059 = vmax.f32 %v1025, %v1043
        %v1060 = vadd.f32 %v628, %v1044
        %v1061 = vadd.f32 %v629, %v1045
        %v1062 = vadd.f32 %v630, %v1046
        %v1063 = vadd.f32 %v631, %v1047
        %v1064 = vadd.f32 %v632, %v1048
        %v1065 = vadd.f32 %v633, %v1049
        %v1066 = vadd.f32 %v634, %v1050
        %v1067 = vadd.f32 %v635, %v1051
        %v1068 = vadd.f32 %v636, %v1052
        %v1069 = vadd.f32 %v637, %v1053
        %v1070 = vadd.f32 %v638, %v1054
        %v1071 = vadd.f32 %v639, %v1055
        %v1072 = vadd.f32 %v640, %v1056
        %v1073 = vadd.f32 %v641, %v1057
        %v1074 = vadd.f32 %v642, %v1058
        %v1075 = vadd.f32 %v643, %v1059
        %v1076 = vpack.c.bf16 %v1061, %v1060
        %v1077 = vpack.c.bf16 %v1063, %v1062
        %v1078 = vpack.c.bf16 %v1065, %v1064
        %v1079 = vpack.c.bf16 %v1067, %v1066
        %v1080 = vpack.c.bf16 %v1069, %v1068
        %v1081 = vpack.c.bf16 %v1071, %v1070
        %v1082 = vpack.c.bf16 %v1073, %v1072
        %v1083 = vpack.c.bf16 %v1075, %v1074
        %v1084 = vld [vmem:[%s7] sm:$0xf]
        %v1085 = vld [vmem:[%s7 + $0x4] sm:$0xf]
        %v1086 = vld [vmem:[%s7 + $0x8] sm:$0xf]
        %v1087 = vld [vmem:[%s7 + $0xc] sm:$0xf]
        %v1088 = vld [vmem:[%s7 + $0x10] sm:$0xf]
        %v1089 = vld [vmem:[%s7 + $0x14] sm:$0xf]
        %v1090 = vld [vmem:[%s7 + $0x18] sm:$0xf]
        %v1091 = vld [vmem:[%s7 + $0x1c] sm:$0xf]
        %v1092 = vld [vmem:[%s7 + $0x20] sm:$0xf]
        %v1093 = vld [vmem:[%s7 + $0x24] sm:$0xf]
        %v1094 = vld [vmem:[%s7 + $0x28] sm:$0xf]
        %v1095 = vld [vmem:[%s7 + $0x2c] sm:$0xf]
        %v1096 = vld [vmem:[%s7 + $0x30] sm:$0xf]
        %v1097 = vld [vmem:[%s7 + $0x34] sm:$0xf]
        %v1098 = vld [vmem:[%s7 + $0x38] sm:$0xf]
        %v1099 = vld [vmem:[%s7 + $0x3c] sm:$0xf]
        %v1100 = vld [vmem:[%s8] sm:$0x1]
        %v1102 = vlaneseq
        %v1103 = vshrl.u32 %v1102, 7
        %v1104 = vsub.s32 0, %v1103
        %v1105 = vrot.slane %v1100, %v1104
        %v1123 = vunpack.c.l.b16 %v1084
        %v1124 = vunpack.c.l.b16 %v1085
        %v1125 = vunpack.c.l.b16 %v1086
        %v1126 = vunpack.c.l.b16 %v1087
        %v1127 = vunpack.c.l.b16 %v1088
        %v1128 = vunpack.c.l.b16 %v1089
        %v1129 = vunpack.c.l.b16 %v1090
        %v1130 = vunpack.c.l.b16 %v1091
        %v1131 = vunpack.c.l.b16 %v1092
        %v1132 = vunpack.c.l.b16 %v1093
        %v1133 = vunpack.c.l.b16 %v1094
        %v1134 = vunpack.c.l.b16 %v1095
        %v1135 = vunpack.c.l.b16 %v1096
        %v1136 = vunpack.c.l.b16 %v1097
        %v1137 = vunpack.c.l.b16 %v1098
        %v1138 = vunpack.c.l.b16 %v1099
        %v1139 = vpack.c.b16 %v1124, %v1123
        %v1140 = vpack.c.b16 %v1126, %v1125
        %v1141 = vpack.c.b16 %v1128, %v1127
        %v1142 = vpack.c.b16 %v1130, %v1129
        %v1143 = vpack.c.b16 %v1132, %v1131
        %v1144 = vpack.c.b16 %v1134, %v1133
        %v1145 = vpack.c.b16 %v1136, %v1135
        %v1146 = vpack.c.b16 %v1138, %v1137
        %1155 = vmatprep.subr.bf16.mxu0 0
        %1156 = vmatpush1.bf16.msra.mxu0 %v1139
        %1157 = vmatprep.subr.bf16.mxu0 0
        %1158 = vmatpush1.bf16.msra.mxu0 %v1140
        %1159 = vmatprep.subr.bf16.mxu0 0
        %1160 = vmatpush1.bf16.msra.mxu0 %v1141
        %1161 = vmatprep.subr.bf16.mxu0 0
        %1162 = vmatpush1.bf16.msra.mxu0 %v1142
        %1163 = vmatprep.subr.bf16.mxu0 0
        %1164 = vmatpush1.bf16.msra.mxu0 %v1143
        %1165 = vmatprep.subr.bf16.mxu0 0
        %1166 = vmatpush1.bf16.msra.mxu0 %v1144
        %1167 = vmatprep.subr.bf16.mxu0 0
        %1168 = vmatpush1.bf16.msra.mxu0 %v1145
        %1169 = vmatprep.subr.bf16.mxu0 0
        %1170 = vmatpush1.bf16.msra.mxu0 %v1146
        %1171 = vmatprep.subr.bf16.mxu0 0
        %1172 = vmatpush1.bf16.msra.mxu0 0
        %1173 = vmatprep.subr.bf16.mxu0 0
        %1174 = vmatpush1.bf16.msra.mxu0 0
        %1175 = vmatprep.subr.bf16.mxu0 0
        %1176 = vmatpush1.bf16.msra.mxu0 0
        %1177 = vmatprep.subr.bf16.mxu0 0
        %1178 = vmatpush1.bf16.msra.mxu0 0
        %1179 = vmatprep.subr.bf16.mxu0 0
        %1180 = vmatpush1.bf16.msra.mxu0 0
        %1181 = vmatprep.subr.bf16.mxu0 0
        %1182 = vmatpush1.bf16.msra.mxu0 0
        %1183 = vmatprep.subr.bf16.mxu0 0
        %1184 = vmatpush1.bf16.msra.mxu0 0
        %1185 = vmatprep.subr.bf16.mxu0 0
        %1186 = vmatpush1.bf16.msra.mxu0 0
        %1187 = vmatprep.mubr.bf16.mxu0 0
        %1188 = vmatmul.mubr.bf16.gmra.mrb[0].mxu0 %v1076
        %v1189 = vpop.f32.mrb[0].mxu0
        %v1190 = vadd.f32 %v1105, %v1189
        %v1191 = vpop.f32.mrb[0].mxu0
        %v1192 = vpop.f32.mrb[0].mxu0
        %v1193 = vadd.f32 %v1105, %v1192
        %v1194 = vpop.f32.mrb[0].mxu0
        %1195 = vmatprep.mubr.bf16.mxu0 0
        %1196 = vmatmul.mubr.bf16.gmra.mrb[0].mxu0 %v1077
        %v1197 = vpop.f32.mrb[0].mxu0
        %v1198 = vadd.f32 %v1105, %v1197
        %v1199 = vpop.f32.mrb[0].mxu0
        %v1200 = vpop.f32.mrb[0].mxu0
        %v1201 = vadd.f32 %v1105, %v1200
        %v1202 = vpop.f32.mrb[0].mxu0
        %1203 = vmatprep.mubr.bf16.mxu0 0
        %1204 = vmatmul.mubr.bf16.gmra.mrb[0].mxu0 %v1078
        %v1205 = vpop.f32.mrb[0].mxu0
        %v1206 = vadd.f32 %v1105, %v1205
        %v1207 = vpop.f32.mrb[0].mxu0
        %v1208 = vpop.f32.mrb[0].mxu0
        %v1209 = vadd.f32 %v1105, %v1208
        %v1210 = vpop.f32.mrb[0].mxu0
        %1211 = vmatprep.mubr.bf16.mxu0 0
        %1212 = vmatmul.mubr.bf16.gmra.mrb[0].mxu0 %v1079
        %v1213 = vpop.f32.mrb[0].mxu0
        %v1214 = vadd.f32 %v1105, %v1213
        %v1215 = vpop.f32.mrb[0].mxu0
        %v1216 = vpop.f32.mrb[0].mxu0
        %v1217 = vadd.f32 %v1105, %v1216
        %v1218 = vpop.f32.mrb[0].mxu0
        %1219 = vmatprep.mubr.bf16.mxu0 0
        %1220 = vmatmul.mubr.bf16.gmra.mrb[0].mxu0 %v1080
        %v1221 = vpop.f32.mrb[0].mxu0
        %v1222 = vadd.f32 %v1105, %v1221
        %v1223 = vpop.f32.mrb[0].mxu0
        %v1224 = vpop.f32.mrb[0].mxu0
        %v1225 = vadd.f32 %v1105, %v1224
        %v1226 = vpop.f32.mrb[0].mxu0
        %1227 = vmatprep.mubr.bf16.mxu0 0
        %1228 = vmatmul.mubr.bf16.gmra.mrb[0].mxu0 %v1081
        %v1229 = vpop.f32.mrb[0].mxu0
        %v1230 = vadd.f32 %v1105, %v1229
        %v1231 = vpop.f32.mrb[0].mxu0
        %v1232 = vpop.f32.mrb[0].mxu0
        %v1233 = vadd.f32 %v1105, %v1232
        %v1234 = vpop.f32.mrb[0].mxu0
        %1235 = vmatprep.mubr.bf16.mxu0 0
        %1236 = vmatmul.mubr.bf16.gmra.mrb[0].mxu0 %v1082
        %v1237 = vpop.f32.mrb[0].mxu0
        %v1238 = vadd.f32 %v1105, %v1237
        %v1239 = vpop.f32.mrb[0].mxu0
        %v1240 = vpop.f32.mrb[0].mxu0
        %v1241 = vadd.f32 %v1105, %v1240
        %v1242 = vpop.f32.mrb[0].mxu0
        %1243 = vmatprep.mubr.bf16.mxu0 0
        %1244 = vmatmul.mubr.bf16.gmra.mrb[0].mxu0 %v1083
        %v1245 = vpop.f32.mrb[0].mxu0
        %v1246 = vadd.f32 %v1105, %v1245
        %v1247 = vpop.f32.mrb[0].mxu0
        %v1248 = vpop.f32.mrb[0].mxu0
        %v1249 = vadd.f32 %v1105, %v1248
        %v1250 = vpop.f32.mrb[0].mxu0
        %1251 = vdwg.mxu0
        %v1252 = vmul.f32 %v1190, 0.2
        %v1253 = vmul.f32 %v1193, 0.2
        %v1254 = vmul.f32 %v1198, 0.2
        %v1255 = vmul.f32 %v1201, 0.2
        %v1256 = vmul.f32 %v1206, 0.2
        %v1257 = vmul.f32 %v1209, 0.2
        %v1258 = vmul.f32 %v1214, 0.2
        %v1259 = vmul.f32 %v1217, 0.2
        %v1260 = vmul.f32 %v1222, 0.2
        %v1261 = vmul.f32 %v1225, 0.2
        %v1262 = vmul.f32 %v1230, 0.2
        %v1263 = vmul.f32 %v1233, 0.2
        %v1264 = vmul.f32 %v1238, 0.2
        %v1265 = vmul.f32 %v1241, 0.2
        %v1266 = vmul.f32 %v1246, 0.2
        %v1267 = vmul.f32 %v1249, 0.2
        %v1268 = vmax.f32 %v1190, %v1252
        %v1269 = vmax.f32 %v1193, %v1253
        %v1270 = vmax.f32 %v1198, %v1254
        %v1271 = vmax.f32 %v1201, %v1255
        %v1272 = vmax.f32 %v1206, %v1256
        %v1273 = vmax.f32 %v1209, %v1257
        %v1274 = vmax.f32 %v1214, %v1258
        %v1275 = vmax.f32 %v1217, %v1259
        %v1276 = vmax.f32 %v1222, %v1260
        %v1277 = vmax.f32 %v1225, %v1261
        %v1278 = vmax.f32 %v1230, %v1262
        %v1279 = vmax.f32 %v1233, %v1263
        %v1280 = vmax.f32 %v1238, %v1264
        %v1281 = vmax.f32 %v1241, %v1265
        %v1282 = vmax.f32 %v1246, %v1266
        %v1283 = vmax.f32 %v1249, %v1267
        %v1284 = vpack.c.bf16 %v1269, %v1268
        %v1285 = vpack.c.bf16 %v1271, %v1270
        %v1286 = vpack.c.bf16 %v1273, %v1272
        %v1287 = vpack.c.bf16 %v1275, %v1274
        %v1288 = vpack.c.bf16 %v1277, %v1276
        %v1289 = vpack.c.bf16 %v1279, %v1278
        %v1290 = vpack.c.bf16 %v1281, %v1280
        %v1291 = vpack.c.bf16 %v1283, %v1282
        %v1292 = vld [vmem:[%s9] sm:$0xf]
        %v1293 = vld [vmem:[%s9 + $0x4] sm:$0xf]
        %v1294 = vld [vmem:[%s9 + $0x8] sm:$0xf]
        %v1295 = vld [vmem:[%s9 + $0xc] sm:$0xf]
        %v1296 = vld [vmem:[%s9 + $0x10] sm:$0xf]
        %v1297 = vld [vmem:[%s9 + $0x14] sm:$0xf]
        %v1298 = vld [vmem:[%s9 + $0x18] sm:$0xf]
        %v1299 = vld [vmem:[%s9 + $0x1c] sm:$0xf]
        %v1300 = vld [vmem:[%s9 + $0x20] sm:$0xf]
        %v1301 = vld [vmem:[%s9 + $0x24] sm:$0xf]
        %v1302 = vld [vmem:[%s9 + $0x28] sm:$0xf]
        %v1303 = vld [vmem:[%s9 + $0x2c] sm:$0xf]
        %v1304 = vld [vmem:[%s9 + $0x30] sm:$0xf]
        %v1305 = vld [vmem:[%s9 + $0x34] sm:$0xf]
        %v1306 = vld [vmem:[%s9 + $0x38] sm:$0xf]
        %v1307 = vld [vmem:[%s9 + $0x3c] sm:$0xf]
        %v1308 = vld [vmem:[%s10] sm:$0x1]
        %v1310 = vlaneseq
        %v1311 = vshrl.u32 %v1310, 7
        %v1312 = vsub.s32 0, %v1311
        %v1313 = vrot.slane %v1308, %v1312
        %v1331 = vunpack.c.l.b16 %v1292
        %v1332 = vunpack.c.l.b16 %v1293
        %v1333 = vunpack.c.l.b16 %v1294
        %v1334 = vunpack.c.l.b16 %v1295
        %v1335 = vunpack.c.l.b16 %v1296
        %v1336 = vunpack.c.l.b16 %v1297
        %v1337 = vunpack.c.l.b16 %v1298
        %v1338 = vunpack.c.l.b16 %v1299
        %v1339 = vunpack.c.l.b16 %v1300
        %v1340 = vunpack.c.l.b16 %v1301
        %v1341 = vunpack.c.l.b16 %v1302
        %v1342 = vunpack.c.l.b16 %v1303
        %v1343 = vunpack.c.l.b16 %v1304
        %v1344 = vunpack.c.l.b16 %v1305
        %v1345 = vunpack.c.l.b16 %v1306
        %v1346 = vunpack.c.l.b16 %v1307
        %v1347 = vpack.c.b16 %v1332, %v1331
        %v1348 = vpack.c.b16 %v1334, %v1333
        %v1349 = vpack.c.b16 %v1336, %v1335
        %v1350 = vpack.c.b16 %v1338, %v1337
        %v1351 = vpack.c.b16 %v1340, %v1339
        %v1352 = vpack.c.b16 %v1342, %v1341
        %v1353 = vpack.c.b16 %v1344, %v1343
        %v1354 = vpack.c.b16 %v1346, %v1345
        %1363 = vmatprep.subr.bf16.mxu0 0
        %1364 = vmatpush1.bf16.msra.mxu0 %v1347
        %1365 = vmatprep.subr.bf16.mxu0 0
        %1366 = vmatpush1.bf16.msra.mxu0 %v1348
        %1367 = vmatprep.subr.bf16.mxu0 0
        %1368 = vmatpush1.bf16.msra.mxu0 %v1349
        %1369 = vmatprep.subr.bf16.mxu0 0
        %1370 = vmatpush1.bf16.msra.mxu0 %v1350
        %1371 = vmatprep.subr.bf16.mxu0 0
        %1372 = vmatpush1.bf16.msra.mxu0 %v1351
        %1373 = vmatprep.subr.bf16.mxu0 0
        %1374 = vmatpush1.bf16.msra.mxu0 %v1352
        %1375 = vmatprep.subr.bf16.mxu0 0
        %1376 = vmatpush1.bf16.msra.mxu0 %v1353
        %1377 = vmatprep.subr.bf16.mxu0 0
        %1378 = vmatpush1.bf16.msra.mxu0 %v1354
        %1379 = vmatprep.subr.bf16.mxu0 0
        %1380 = vmatpush1.bf16.msra.mxu0 0
        %1381 = vmatprep.subr.bf16.mxu0 0
        %1382 = vmatpush1.bf16.msra.mxu0 0
        %1383 = vmatprep.subr.bf16.mxu0 0
        %1384 = vmatpush1.bf16.msra.mxu0 0
        %1385 = vmatprep.subr.bf16.mxu0 0
        %1386 = vmatpush1.bf16.msra.mxu0 0
        %1387 = vmatprep.subr.bf16.mxu0 0
        %1388 = vmatpush1.bf16.msra.mxu0 0
        %1389 = vmatprep.subr.bf16.mxu0 0
        %1390 = vmatpush1.bf16.msra.mxu0 0
        %1391 = vmatprep.subr.bf16.mxu0 0
        %1392 = vmatpush1.bf16.msra.mxu0 0
        %1393 = vmatprep.subr.bf16.mxu0 0
        %1394 = vmatpush1.bf16.msra.mxu0 0
        %1395 = vmatprep.mubr.bf16.mxu0 0
        %1396 = vmatmul.mubr.bf16.gmra.mrb[0].mxu0 %v1284
        %v1397 = vpop.f32.mrb[0].mxu0
        %v1398 = vadd.f32 %v1313, %v1397
        %v1399 = vpop.f32.mrb[0].mxu0
        %v1400 = vpop.f32.mrb[0].mxu0
        %v1401 = vadd.f32 %v1313, %v1400
        %v1402 = vpop.f32.mrb[0].mxu0
        %1403 = vmatprep.mubr.bf16.mxu0 0
        %1404 = vmatmul.mubr.bf16.gmra.mrb[0].mxu0 %v1285
        %v1405 = vpop.f32.mrb[0].mxu0
        %v1406 = vadd.f32 %v1313, %v1405
        %v1407 = vpop.f32.mrb[0].mxu0
        %v1408 = vpop.f32.mrb[0].mxu0
        %v1409 = vadd.f32 %v1313, %v1408
        %v1410 = vpop.f32.mrb[0].mxu0
        %1411 = vmatprep.mubr.bf16.mxu0 0
        %1412 = vmatmul.mubr.bf16.gmra.mrb[0].mxu0 %v1286
        %v1413 = vpop.f32.mrb[0].mxu0
        %v1414 = vadd.f32 %v1313, %v1413
        %v1415 = vpop.f32.mrb[0].mxu0
        %v1416 = vpop.f32.mrb[0].mxu0
        %v1417 = vadd.f32 %v1313, %v1416
        %v1418 = vpop.f32.mrb[0].mxu0
        %1419 = vmatprep.mubr.bf16.mxu0 0
        %1420 = vmatmul.mubr.bf16.gmra.mrb[0].mxu0 %v1287
        %v1421 = vpop.f32.mrb[0].mxu0
        %v1422 = vadd.f32 %v1313, %v1421
        %v1423 = vpop.f32.mrb[0].mxu0
        %v1424 = vpop.f32.mrb[0].mxu0
        %v1425 = vadd.f32 %v1313, %v1424
        %v1426 = vpop.f32.mrb[0].mxu0
        %1427 = vmatprep.mubr.bf16.mxu0 0
        %1428 = vmatmul.mubr.bf16.gmra.mrb[0].mxu0 %v1288
        %v1429 = vpop.f32.mrb[0].mxu0
        %v1430 = vadd.f32 %v1313, %v1429
        %v1431 = vpop.f32.mrb[0].mxu0
        %v1432 = vpop.f32.mrb[0].mxu0
        %v1433 = vadd.f32 %v1313, %v1432
        %v1434 = vpop.f32.mrb[0].mxu0
        %1435 = vmatprep.mubr.bf16.mxu0 0
        %1436 = vmatmul.mubr.bf16.gmra.mrb[0].mxu0 %v1289
        %v1437 = vpop.f32.mrb[0].mxu0
        %v1438 = vadd.f32 %v1313, %v1437
        %v1439 = vpop.f32.mrb[0].mxu0
        %v1440 = vpop.f32.mrb[0].mxu0
        %v1441 = vadd.f32 %v1313, %v1440
        %v1442 = vpop.f32.mrb[0].mxu0
        %1443 = vmatprep.mubr.bf16.mxu0 0
        %1444 = vmatmul.mubr.bf16.gmra.mrb[0].mxu0 %v1290
        %v1445 = vpop.f32.mrb[0].mxu0
        %v1446 = vadd.f32 %v1313, %v1445
        %v1447 = vpop.f32.mrb[0].mxu0
        %v1448 = vpop.f32.mrb[0].mxu0
        %v1449 = vadd.f32 %v1313, %v1448
        %v1450 = vpop.f32.mrb[0].mxu0
        %1451 = vmatprep.mubr.bf16.mxu0 0
        %1452 = vmatmul.mubr.bf16.gmra.mrb[0].mxu0 %v1291
        %v1453 = vpop.f32.mrb[0].mxu0
        %v1454 = vadd.f32 %v1313, %v1453
        %v1455 = vpop.f32.mrb[0].mxu0
        %v1456 = vpop.f32.mrb[0].mxu0
        %v1457 = vadd.f32 %v1313, %v1456
        %v1458 = vpop.f32.mrb[0].mxu0
        %1459 = vdwg.mxu0
        %v1460 = vmul.f32 %v1398, 0.2
        %v1461 = vmul.f32 %v1401, 0.2
        %v1462 = vmul.f32 %v1406, 0.2
        %v1463 = vmul.f32 %v1409, 0.2
        %v1464 = vmul.f32 %v1414, 0.2
        %v1465 = vmul.f32 %v1417, 0.2
        %v1466 = vmul.f32 %v1422, 0.2
        %v1467 = vmul.f32 %v1425, 0.2
        %v1468 = vmul.f32 %v1430, 0.2
        %v1469 = vmul.f32 %v1433, 0.2
        %v1470 = vmul.f32 %v1438, 0.2
        %v1471 = vmul.f32 %v1441, 0.2
        %v1472 = vmul.f32 %v1446, 0.2
        %v1473 = vmul.f32 %v1449, 0.2
        %v1474 = vmul.f32 %v1454, 0.2
        %v1475 = vmul.f32 %v1457, 0.2
        %v1476 = vmax.f32 %v1398, %v1460
        %v1477 = vmax.f32 %v1401, %v1461
        %v1478 = vmax.f32 %v1406, %v1462
        %v1479 = vmax.f32 %v1409, %v1463
        %v1480 = vmax.f32 %v1414, %v1464
        %v1481 = vmax.f32 %v1417, %v1465
        %v1482 = vmax.f32 %v1422, %v1466
        %v1483 = vmax.f32 %v1425, %v1467
        %v1484 = vmax.f32 %v1430, %v1468
        %v1485 = vmax.f32 %v1433, %v1469
        %v1486 = vmax.f32 %v1438, %v1470
        %v1487 = vmax.f32 %v1441, %v1471
        %v1488 = vmax.f32 %v1446, %v1472
        %v1489 = vmax.f32 %v1449, %v1473
        %v1490 = vmax.f32 %v1454, %v1474
        %v1491 = vmax.f32 %v1457, %v1475
        %v1492 = vadd.f32 %v1060, %v1476
        %v1493 = vadd.f32 %v1061, %v1477
        %v1494 = vadd.f32 %v1062, %v1478
        %v1495 = vadd.f32 %v1063, %v1479
        %v1496 = vadd.f32 %v1064, %v1480
        %v1497 = vadd.f32 %v1065, %v1481
        %v1498 = vadd.f32 %v1066, %v1482
        %v1499 = vadd.f32 %v1067, %v1483
        %v1500 = vadd.f32 %v1068, %v1484
        %v1501 = vadd.f32 %v1069, %v1485
        %v1502 = vadd.f32 %v1070, %v1486
        %v1503 = vadd.f32 %v1071, %v1487
        %v1504 = vadd.f32 %v1072, %v1488
        %v1505 = vadd.f32 %v1073, %v1489
        %v1506 = vadd.f32 %v1074, %v1490
        %v1507 = vadd.f32 %v1075, %v1491
        %v1508 = vpack.c.bf16 %v1493, %v1492
        %v1509 = vpack.c.bf16 %v1495, %v1494
        %v1510 = vpack.c.bf16 %v1497, %v1496
        %v1511 = vpack.c.bf16 %v1499, %v1498
        %v1512 = vpack.c.bf16 %v1501, %v1500
        %v1513 = vpack.c.bf16 %v1503, %v1502
        %v1514 = vpack.c.bf16 %v1505, %v1504
        %v1515 = vpack.c.bf16 %v1507, %v1506
        %v1516 = vld [vmem:[%s11] sm:$0xf]
        %v1517 = vld [vmem:[%s11 + $0x4] sm:$0xf]
        %v1518 = vld [vmem:[%s11 + $0x8] sm:$0xf]
        %v1519 = vld [vmem:[%s11 + $0xc] sm:$0xf]
        %v1520 = vld [vmem:[%s11 + $0x10] sm:$0xf]
        %v1521 = vld [vmem:[%s11 + $0x14] sm:$0xf]
        %v1522 = vld [vmem:[%s11 + $0x18] sm:$0xf]
        %v1523 = vld [vmem:[%s11 + $0x1c] sm:$0xf]
        %v1524 = vld [vmem:[%s11 + $0x20] sm:$0xf]
        %v1525 = vld [vmem:[%s11 + $0x24] sm:$0xf]
        %v1526 = vld [vmem:[%s11 + $0x28] sm:$0xf]
        %v1527 = vld [vmem:[%s11 + $0x2c] sm:$0xf]
        %v1528 = vld [vmem:[%s11 + $0x30] sm:$0xf]
        %v1529 = vld [vmem:[%s11 + $0x34] sm:$0xf]
        %v1530 = vld [vmem:[%s11 + $0x38] sm:$0xf]
        %v1531 = vld [vmem:[%s11 + $0x3c] sm:$0xf]
        %v1532 = vld [vmem:[%s12] sm:$0x1]
        %v1534 = vlaneseq
        %v1535 = vshrl.u32 %v1534, 7
        %v1536 = vsub.s32 0, %v1535
        %v1537 = vrot.slane %v1532, %v1536
        %v1555 = vunpack.c.l.b16 %v1516
        %v1556 = vunpack.c.l.b16 %v1517
        %v1557 = vunpack.c.l.b16 %v1518
        %v1558 = vunpack.c.l.b16 %v1519
        %v1559 = vunpack.c.l.b16 %v1520
        %v1560 = vunpack.c.l.b16 %v1521
        %v1561 = vunpack.c.l.b16 %v1522
        %v1562 = vunpack.c.l.b16 %v1523
        %v1563 = vunpack.c.l.b16 %v1524
        %v1564 = vunpack.c.l.b16 %v1525
        %v1565 = vunpack.c.l.b16 %v1526
        %v1566 = vunpack.c.l.b16 %v1527
        %v1567 = vunpack.c.l.b16 %v1528
        %v1568 = vunpack.c.l.b16 %v1529
        %v1569 = vunpack.c.l.b16 %v1530
        %v1570 = vunpack.c.l.b16 %v1531
        %v1571 = vpack.c.b16 %v1556, %v1555
        %v1572 = vpack.c.b16 %v1558, %v1557
        %v1573 = vpack.c.b16 %v1560, %v1559
        %v1574 = vpack.c.b16 %v1562, %v1561
        %v1575 = vpack.c.b16 %v1564, %v1563
        %v1576 = vpack.c.b16 %v1566, %v1565
        %v1577 = vpack.c.b16 %v1568, %v1567
        %v1578 = vpack.c.b16 %v1570, %v1569
        %1587 = vmatprep.subr.bf16.mxu0 0
        %1588 = vmatpush1.bf16.msra.mxu0 %v1571
        %1589 = vmatprep.subr.bf16.mxu0 0
        %1590 = vmatpush1.bf16.msra.mxu0 %v1572
        %1591 = vmatprep.subr.bf16.mxu0 0
        %1592 = vmatpush1.bf16.msra.mxu0 %v1573
        %1593 = vmatprep.subr.bf16.mxu0 0
        %1594 = vmatpush1.bf16.msra.mxu0 %v1574
        %1595 = vmatprep.subr.bf16.mxu0 0
        %1596 = vmatpush1.bf16.msra.mxu0 %v1575
        %1597 = vmatprep.subr.bf16.mxu0 0
        %1598 = vmatpush1.bf16.msra.mxu0 %v1576
        %1599 = vmatprep.subr.bf16.mxu0 0
        %1600 = vmatpush1.bf16.msra.mxu0 %v1577
        %1601 = vmatprep.subr.bf16.mxu0 0
        %1602 = vmatpush1.bf16.msra.mxu0 %v1578
        %1603 = vmatprep.subr.bf16.mxu0 0
        %1604 = vmatpush1.bf16.msra.mxu0 0
        %1605 = vmatprep.subr.bf16.mxu0 0
        %1606 = vmatpush1.bf16.msra.mxu0 0
        %1607 = vmatprep.subr.bf16.mxu0 0
        %1608 = vmatpush1.bf16.msra.mxu0 0
        %1609 = vmatprep.subr.bf16.mxu0 0
        %1610 = vmatpush1.bf16.msra.mxu0 0
        %1611 = vmatprep.subr.bf16.mxu0 0
        %1612 = vmatpush1.bf16.msra.mxu0 0
        %1613 = vmatprep.subr.bf16.mxu0 0
        %1614 = vmatpush1.bf16.msra.mxu0 0
        %1615 = vmatprep.subr.bf16.mxu0 0
        %1616 = vmatpush1.bf16.msra.mxu0 0
        %1617 = vmatprep.subr.bf16.mxu0 0
        %1618 = vmatpush1.bf16.msra.mxu0 0
        %1619 = vmatprep.mubr.bf16.mxu0 0
        %1620 = vmatmul.mubr.bf16.gmra.mrb[0].mxu0 %v1508
        %v1621 = vpop.f32.mrb[0].mxu0
        %v1622 = vadd.f32 %v1537, %v1621
        %v1623 = vpop.f32.mrb[0].mxu0
        %v1624 = vpop.f32.mrb[0].mxu0
        %v1625 = vadd.f32 %v1537, %v1624
        %v1626 = vpop.f32.mrb[0].mxu0
        %1627 = vmatprep.mubr.bf16.mxu0 0
        %1628 = vmatmul.mubr.bf16.gmra.mrb[0].mxu0 %v1509
        %v1629 = vpop.f32.mrb[0].mxu0
        %v1630 = vadd.f32 %v1537, %v1629
        %v1631 = vpop.f32.mrb[0].mxu0
        %v1632 = vpop.f32.mrb[0].mxu0
        %v1633 = vadd.f32 %v1537, %v1632
        %v1634 = vpop.f32.mrb[0].mxu0
        %1635 = vmatprep.mubr.bf16.mxu0 0
        %1636 = vmatmul.mubr.bf16.gmra.mrb[0].mxu0 %v1510
        %v1637 = vpop.f32.mrb[0].mxu0
        %v1638 = vadd.f32 %v1537, %v1637
        %v1639 = vpop.f32.mrb[0].mxu0
        %v1640 = vpop.f32.mrb[0].mxu0
        %v1641 = vadd.f32 %v1537, %v1640
        %v1642 = vpop.f32.mrb[0].mxu0
        %1643 = vmatprep.mubr.bf16.mxu0 0
        %1644 = vmatmul.mubr.bf16.gmra.mrb[0].mxu0 %v1511
        %v1645 = vpop.f32.mrb[0].mxu0
        %v1646 = vadd.f32 %v1537, %v1645
        %v1647 = vpop.f32.mrb[0].mxu0
        %v1648 = vpop.f32.mrb[0].mxu0
        %v1649 = vadd.f32 %v1537, %v1648
        %v1650 = vpop.f32.mrb[0].mxu0
        %1651 = vmatprep.mubr.bf16.mxu0 0
        %1652 = vmatmul.mubr.bf16.gmra.mrb[0].mxu0 %v1512
        %v1653 = vpop.f32.mrb[0].mxu0
        %v1654 = vadd.f32 %v1537, %v1653
        %v1655 = vpop.f32.mrb[0].mxu0
        %v1656 = vpop.f32.mrb[0].mxu0
        %v1657 = vadd.f32 %v1537, %v1656
        %v1658 = vpop.f32.mrb[0].mxu0
        %1659 = vmatprep.mubr.bf16.mxu0 0
        %1660 = vmatmul.mubr.bf16.gmra.mrb[0].mxu0 %v1513
        %v1661 = vpop.f32.mrb[0].mxu0
        %v1662 = vadd.f32 %v1537, %v1661
        %v1663 = vpop.f32.mrb[0].mxu0
        %v1664 = vpop.f32.mrb[0].mxu0
        %v1665 = vadd.f32 %v1537, %v1664
        %v1666 = vpop.f32.mrb[0].mxu0
        %1667 = vmatprep.mubr.bf16.mxu0 0
        %1668 = vmatmul.mubr.bf16.gmra.mrb[0].mxu0 %v1514
        %v1669 = vpop.f32.mrb[0].mxu0
        %v1670 = vadd.f32 %v1537, %v1669
        %v1671 = vpop.f32.mrb[0].mxu0
        %v1672 = vpop.f32.mrb[0].mxu0
        %v1673 = vadd.f32 %v1537, %v1672
        %v1674 = vpop.f32.mrb[0].mxu0
        %1675 = vmatprep.mubr.bf16.mxu0 0
        %1676 = vmatmul.mubr.bf16.gmra.mrb[0].mxu0 %v1515
        %v1677 = vpop.f32.mrb[0].mxu0
        %v1678 = vadd.f32 %v1537, %v1677
        %v1679 = vpop.f32.mrb[0].mxu0
        %v1680 = vpop.f32.mrb[0].mxu0
        %v1681 = vadd.f32 %v1537, %v1680
        %v1682 = vpop.f32.mrb[0].mxu0
        %1683 = vdwg.mxu0
        %v1684 = vpack.c.bf16 %v1625, %v1622
        %v1685 = vpack.c.bf16 %v1633, %v1630
        %v1686 = vpack.c.bf16 %v1641, %v1638
        %v1687 = vpack.c.bf16 %v1649, %v1646
        %v1688 = vpack.c.bf16 %v1657, %v1654
        %v1689 = vpack.c.bf16 %v1665, %v1662
        %v1690 = vpack.c.bf16 %v1673, %v1670
        %v1691 = vpack.c.bf16 %v1681, %v1678
        %v1700 = vunpack.c.l.b16 %v1684
        %v1701 = vunpack.c.h.b16 %v1684
        %v1702 = vunpack.c.l.b16 %v1685
        %v1703 = vunpack.c.h.b16 %v1685
        %v1704 = vunpack.c.l.b16 %v1686
        %v1705 = vunpack.c.h.b16 %v1686
        %v1706 = vunpack.c.l.b16 %v1687
        %v1707 = vunpack.c.h.b16 %v1687
        %v1708 = vunpack.c.l.b16 %v1688
        %v1709 = vunpack.c.h.b16 %v1688
        %v1710 = vunpack.c.l.b16 %v1689
        %v1711 = vunpack.c.h.b16 %v1689
        %v1712 = vunpack.c.l.b16 %v1690
        %v1713 = vunpack.c.h.b16 %v1690
        %v1714 = vunpack.c.l.b16 %v1691
        %v1715 = vunpack.c.h.b16 %v1691
        %v1716 = vpack.c.b16 %v1700, %v1700
        %v1717 = vpack.c.b16 %v1701, %v1701
        %v1718 = vpack.c.b16 %v1702, %v1702
        %v1719 = vpack.c.b16 %v1703, %v1703
        %v1720 = vpack.c.b16 %v1704, %v1704
        %v1721 = vpack.c.b16 %v1705, %v1705
        %v1722 = vpack.c.b16 %v1706, %v1706
        %v1723 = vpack.c.b16 %v1707, %v1707
        %v1724 = vpack.c.b16 %v1708, %v1708
        %v1725 = vpack.c.b16 %v1709, %v1709
        %v1726 = vpack.c.b16 %v1710, %v1710
        %v1727 = vpack.c.b16 %v1711, %v1711
        %v1728 = vpack.c.b16 %v1712, %v1712
        %v1729 = vpack.c.b16 %v1713, %v1713
        %v1730 = vpack.c.b16 %v1714, %v1714
        %v1731 = vpack.c.b16 %v1715, %v1715
        %1748 = vst [vmem:[%s434] sm:$0xf] %v1716
        %1749 = vst [vmem:[%s434 + $0x4] sm:$0xf] %v1717
        %1750 = vst [vmem:[%s434 + $0x8] sm:$0xf] %v1718
        %1751 = vst [vmem:[%s434 + $0xc] sm:$0xf] %v1719
        %1752 = vst [vmem:[%s434 + $0x10] sm:$0xf] %v1720
        %1753 = vst [vmem:[%s434 + $0x14] sm:$0xf] %v1721
        %1754 = vst [vmem:[%s434 + $0x18] sm:$0xf] %v1722
        %1755 = vst [vmem:[%s434 + $0x1c] sm:$0xf] %v1723
        %1756 = vst [vmem:[%s434 + $0x20] sm:$0xf] %v1724
        %1757 = vst [vmem:[%s434 + $0x24] sm:$0xf] %v1725
        %1758 = vst [vmem:[%s434 + $0x28] sm:$0xf] %v1726
        %1759 = vst [vmem:[%s434 + $0x2c] sm:$0xf] %v1727
        %1760 = vst [vmem:[%s434 + $0x30] sm:$0xf] %v1728
        %1761 = vst [vmem:[%s434 + $0x34] sm:$0xf] %v1729
        %1762 = vst [vmem:[%s434 + $0x38] sm:$0xf] %v1730
        %1763 = vst [vmem:[%s434 + $0x3c] sm:$0xf] %v1731
        %s1764 = sand.u32 %s313, 1
        %s1765 = scalar_lea.sflag [#allocation3], %s1764
        %s1766 = sand.u32 %s313, 1
        %s1767 = smul.addr %s1766, 64
        %s1768 = scalar_lea.vmem [#allocation2], %s1767
        // Predicated region
        $region73: #{_lambda_.1} parent=71 // pred_check
          %p1769 = pneg %p323
        $region74: #{_lambda_.1} parent=71 // pred_check_branch
          %1771 = sbr.rel (%p1769) target = $region76
        $region75: #{_lambda_.1} parent=71 // pred_region
          %s1772 = smul.u32 16, %s27
          %s1774 = ssub.s32 1024, 1024
          %1775 = vsyncadd %s1765, %s1774
          %s1776 = smul.addr %s1772, 64
          %s1777 = scalar_lea.hbm %s13, %s1776
          %s1778 = sshll.u32 %s1768, 4
          %s1779 = int_to_ptr.vmem [resolvable:$true] %s1778
          %1784 = dma.vmem_to_hbm [thread:$0]  %s1779, 1024, %s1777, %s1765, 64, 64, 4
        $region76: #{_lambda_.1} parent=71 // pred_fallthru
          _
      $region72: #{_lambda_.1} parent=5 // pred_fallthru
        _
      %p1785 = scmp.le.s32.totalorder 2, %s22
      // Predicated region
      $region77: #{_lambda_.1} parent=5 // pred_check
        %p1786 = pneg %p1785
      $region78: #{_lambda_.1} parent=5 // pred_check_branch
        %1788 = sbr.rel (%p1786) target = $region80
      $region79: #{_lambda_.1} parent=5 // pred_region
        %s1789 = ssub.s32 %s22, 2
        // Predicated region
        $region81: #{_lambda_.1} parent=79 // pred_check
          %p1790 = pneg %p329
        $region82: #{_lambda_.1} parent=79 // pred_check_branch
          %1792 = sbr.rel (%p1790) target = $region84
        $region83: #{_lambda_.1} parent=79 // pred_region
          %s1793 = sand.u32 %s314, 1
          %s1794 = scalar_lea.sflag [#allocation3], %s1793
          %s1795 = sand.u32 %s314, 1
          %s1796 = smul.addr %s1795, 64
          %s1797 = scalar_lea.vmem [#allocation2], %s1796
          %1798 = dma.done %s1794, 1024
        $region84: #{_lambda_.1} parent=79 // pred_fallthru
          _
      $region80: #{_lambda_.1} parent=5 // pred_fallthru
        _
    $region6: #{_lambda_.1} parent=1 // loop_footer
      %s26 = sadd.s32 1, %s22
    $region7: #{_lambda_.1} parent=1 // loop_footer_branch
      %21 = sbr.rel target = $region3
    $region8: #{_lambda_.1} parent=1 // loop_exit
      _
    %1799 = vsyncpa [#allocation3], 1
    %s1800 = scalar_lea.sflag [#allocation3], 1
    %1801 = vsyncpa %s1800, 1

</llo_original>
